<compile_context>
chip_gen: v7x
topology: tpu7x:2x2x1
jax: 0.10.0
libtpu: 0.0.40
codegen_flags: <defaults>
</compile_context>

<pallas_src>
import numpy as np
import jax
import jax.numpy as jnp
from jax import lax
from jax.experimental import pallas as pl
from jax.experimental.pallas import tpu as pltpu


# ----------------------------------------------------------------------------
# The fused Pallas kernel
# ----------------------------------------------------------------------------
def pseudo_lenet_kernel(x_ref, w1_ref, b1_ref, w2_ref, b2_ref,
                        fw1_ref, fb1_ref, fw2_ref, fb2_ref, fw3_ref, fb3_ref,
                        o_ref):
    """Whole PseudoLeNet forward for a small batch, entirely in VMEM.

    x_ref  : (8*N, 128) bf16  padded 32x32 image; row g*N+n holds image rows 4g..4g+3
                              flattened as lanes (row-in-group, col).
    w1_ref : (256, 1024) bf16 expanded conv1 weight.  Rows = 8x32 input window of one
                              row-block; cols = 4 pool-offset blocks of 256 lanes, each
                              (rh, rw, b, co) -> rh*84+rw*42+b*6+co (<168), pads zero.
    b1_ref : (1, 256) f32     conv1 bias broadcast over the (rh,rw,b) lanes, 0 on pads.
    w2_ref : (768, 512) bf16  expanded conv2 weight.  Rows = 3 row-shift blocks of 256
                              y1 lanes; cols = 4 pool-offset blocks of 128 lanes, each
                              (oq, co2) -> oq*16+co2 (<80), pads zero.
    b2_ref : (1, 128) f32     conv2 bias, 0 on pads.
    fw1_ref: (640, 120) bf16  fc1 weight, rows permuted to the kernel's (op | oq, co2,
                              pad48) flatten order, zero rows on pads.
    fw2_ref: (120, 84) bf16, fw3_ref: (84, 10) bf16; fb* biases f32, shape (1, D).
    o_ref  : (N, 10) f32      log-probabilities.
    """
    N = o_ref.shape[0]
    xr = x_ref[...]                                               # (8N, 128) bf16

    # ---- ConvBlock(1, 6, 5) + 2x2 max-pool, as ONE matmul -------------------
    # Row-block a needs padded-image rows 4a..4a+7  ->  xr rows {a, a+1} side by side.
    p1 = jnp.concatenate([xr[0:7 * N, :], xr[N:8 * N, :]], axis=1)      # (7N, 256)
    z1 = jnp.dot(p1, w1_ref[...], preferred_element_type=jnp.float32)   # (7N, 1024)
    z1m = jnp.maximum(jnp.maximum(z1[:, 0:256], z1[:, 256:512]),        # max over the
                      jnp.maximum(z1[:, 512:768], z1[:, 768:1024]))     # 4 pool offsets
    y1 = jnp.maximum(z1m + b1_ref[...], 0.0).astype(jnp.bfloat16)       # (7N, 256)

    # ---- ConvBlock(6, 16, 5) + 2x2 max-pool, as ONE matmul ------------------
    # Output row-block op needs y1 row-blocks op..op+2 -> three shifted row slices.
    p2 = jnp.concatenate([y1[0:5 * N, :], y1[N:6 * N, :], y1[2 * N:7 * N, :]],
                         axis=1)                                        # (5N, 768)
    z2 = jnp.dot(p2, w2_ref[...], preferred_element_type=jnp.float32)   # (5N, 512)
    z2m = jnp.maximum(jnp.maximum(z2[:, 0:128], z2[:, 128:256]),
                      jnp.maximum(z2[:, 256:384], z2[:, 384:512]))
    y2 = jnp.maximum(z2m + b2_ref[...], 0.0).astype(jnp.bfloat16)       # (5N, 128)

    # ---- flatten + MLP (single fc1 matmul) + LogSoftmax ---------------------
    yf = jnp.concatenate([y2[op * N:(op + 1) * N, :] for op in range(5)],
                         axis=1)                                        # (N, 640)
    h = jnp.dot(yf, fw1_ref[...], preferred_element_type=jnp.float32) + fb1_ref[...]
    h = jnp.maximum(h, 0.0).astype(jnp.bfloat16)
    h = jnp.dot(h, fw2_ref[...], preferred_element_type=jnp.float32) + fb2_ref[...]
    h = jnp.maximum(h, 0.0).astype(jnp.bfloat16)
    zl = jnp.dot(h, fw3_ref[...], preferred_element_type=jnp.float32) + fb3_ref[...]

    m = jnp.max(zl, axis=-1, keepdims=True)                             # stable logsoftmax
    e = jnp.exp(zl - m)
    o_ref[...] = (zl - m) - jnp.log(jnp.sum(e, axis=-1, keepdims=True))


# ----------------------------------------------------------------------------
# Wrapper-side weight expansion (pure parameter prep; one gather + one where each)
# ----------------------------------------------------------------------------
# Lane layouts used by the kernel:
#   conv1 rows (a, n), a in [0,7): image rows 4a..4a+7; window lane kk = di*32 + jx.
#   conv1 cols e1*256 + u, e1=(dh,dw);  u = rh*84 + rw*42 + b*6 + co  (u < 168).
#     (y1[n, 2a+rh, 2b+rw, co] after the pool-max / bias / ReLU.)
#   conv2 rows (op, n); contraction kk2 = dr*256 + u, dr in {0,1,2} (y1 row-block shift).
#   conv2 cols e2*128 + v, e2=(eh,ew);  v = oq*16 + co2  (v < 80).
#   flatten rows r = op*128 + v  (PyTorch order co2*25+op*5+oq handled in fw1exp).

def _build_w1exp(cw1):
    kk = np.arange(256)
    di, jx = kk // 32, kk % 32
    cc = np.arange(1024)
    e1, u = cc // 256, cc % 256
    dh, dw = e1 // 2, e1 % 2
    used = u < 168
    uu = np.where(used, u, 0)
    rh, rw = uu // 84, (uu % 84) // 42
    b, co = (uu % 42) // 6, uu % 6
    kh = di[:, None] - (2 * rh + dh)[None, :]
    kw = jx[:, None] - (4 * b + 2 * rw + dw)[None, :]
    valid = used[None, :] & (kh >= 0) & (kh < 5) & (kw >= 0) & (kw < 5)
    idx = np.where(valid, co[None, :] * 25 + kh * 5 + kw, 0).astype(np.int32)
    w1flat = cw1.reshape(-1)                                  # (150,) order (co, kh, kw)
    return jnp.where(jnp.asarray(valid), w1flat[jnp.asarray(idx)], 0.0).astype(jnp.bfloat16)


def _build_w2exp(cw2):
    kk = np.arange(768)
    dr, u = kk // 256, kk % 256
    used_r = u < 168
    uu = np.where(used_r, u, 0)
    rh, rw = uu // 84, (uu % 84) // 42
    b, ci = (uu % 42) // 6, uu % 6
    cc = np.arange(512)
    e2, v = cc // 128, cc % 128
    used_c = v < 80
    vv = np.where(used_c, v, 0)
    oq, co2 = vv // 16, vv % 16
    eh, ew = e2 // 2, e2 % 2
    kh = (2 * dr + rh)[:, None] - eh[None, :]
    kw = 2 * (b[:, None] - oq[None, :]) + rw[:, None] - ew[None, :]
    valid = used_r[:, None] & used_c[None, :] & (kh >= 0) & (kh < 5) & (kw >= 0) & (kw < 5)
    idx = np.where(valid, co2[None, :] * 150 + ci[:, None] * 25 + kh * 5 + kw,
                   0).astype(np.int32)
    w2flat = cw2.reshape(-1)                                  # (2400,) order (co2, ci, kh, kw)
    return jnp.where(jnp.asarray(valid), w2flat[jnp.asarray(idx)], 0.0).astype(jnp.bfloat16)


def _build_fw1exp(fw1):
    r = np.arange(640)
    op, v = r // 128, r % 128
    used = v < 80
    vv = np.where(used, v, 0)
    oq, co2 = vv // 16, vv % 16
    col = (co2 * 25 + op * 5 + oq).astype(np.int32)           # PyTorch (c, h, w) flatten
    rows = fw1.T[jnp.asarray(col), :]                         # (640, 120)
    return jnp.where(jnp.asarray(used)[:, None], rows, 0.0).astype(jnp.bfloat16)


def _build_bias1(cb1):
    u = np.arange(256)
    used = u < 168
    co = np.where(used, u % 6, 0).astype(np.int32)
    return jnp.where(jnp.asarray(used), cb1[jnp.asarray(co)], 0.0).reshape(1, 256)


def _build_bias2(cb2):
    v = np.arange(128)
    used = v < 80
    co2 = np.where(used, v % 16, 0).astype(np.int32)
    return jnp.where(jnp.asarray(used), cb2[jnp.asarray(co2)], 0.0).reshape(1, 128)


# ----------------------------------------------------------------------------
# Forward pass: minimal glue + one gridless pallas_call
# ----------------------------------------------------------------------------
def pseudo_lenet_forward(x_nchw, params):
    N = x_nchw.shape[0]
    assert x_nchw.shape[1:] == (1, 28, 28)

    # nn.ConstantPad2d(2, 0) -> (N, 32, 32); bf16; pack 4 image rows per lane-dense row.
    xp = jnp.pad(x_nchw[:, 0], ((0, 0), (2, 2), (2, 2))).astype(jnp.bfloat16)
    xr = xp.reshape(N, 8, 128).transpose(1, 0, 2).reshape(8 * N, 128)

    # Expanded / re-laid-out parameters (constants of the model; built via static numpy
    # index maps + one gather each — in a real deployment these are precomputed once).
    w1e = _build_w1exp(params["cw1"])
    b1e = _build_bias1(params["cb1"])
    w2e = _build_w2exp(params["cw2"])
    b2e = _build_bias2(params["cb2"])
    f1e = _build_fw1exp(params["fw1"])

    args = (xr, w1e, b1e, w2e, b2e,
            f1e, params["fb1"].reshape(1, -1),
            params["fw2"].T.astype(jnp.bfloat16), params["fb2"].reshape(1, -1),
            params["fw3"].T.astype(jnp.bfloat16), params["fb3"].reshape(1, -1))

    vmem = pl.BlockSpec(memory_space=pltpu.MemorySpace.VMEM)
    return pl.pallas_call(
        pseudo_lenet_kernel,
        out_shape=jax.ShapeDtypeStruct((N, 10), jnp.float32),
        in_specs=[vmem] * len(args),
        out_specs=vmem,
    )(*args)


# ----------------------------------------------------------------------------
# Pure-JAX reference (f32, HIGHEST precision) for correctness check
# ----------------------------------------------------------------------------
def pseudo_lenet_reference(x, params):
    hp = lax.Precision.HIGHEST

    def conv_block(x, w, b):
        y = lax.conv_general_dilated(
            x, w, (1, 1), "VALID",
            dimension_numbers=("NCHW", "OIHW", "NCHW"), precision=hp)
        y = jax.nn.relu(y + b[None, :, None, None])
        return lax.reduce_window(y, -jnp.inf, lax.max, (1, 1, 2, 2), (1, 1, 2, 2), "VALID")

    x = jnp.pad(x, ((0, 0), (0, 0), (2, 2), (2, 2)))
    x = conv_block(x, params["cw1"], params["cb1"])
    x = conv_block(x, params["cw2"], params["cb2"])
    x = x.reshape(x.shape[0], -1)
    h = jax.nn.relu(jnp.dot(x, params["fw1"].T, precision=hp) + params["fb1"])
    h = jax.nn.relu(jnp.dot(h, params["fw2"].T, precision=hp) + params["fb2"])
    z = jnp.dot(h, params["fw3"].T, precision=hp) + params["fb3"]
    return jax.nn.log_softmax(z, axis=1)


# ----------------------------------------------------------------------------
# Deterministic parameter init (PyTorch-style uniform bounds; synthetic weights)
# ----------------------------------------------------------------------------
def init_params(key):
    ks = jax.random.split(key, 10)

    def uinit(k, shape, fan_in):
        bound = 1.0 / np.sqrt(fan_in)
        return jax.random.uniform(k, shape, jnp.float32, -bound, bound)

    return {
        "cw1": uinit(ks[0], (6, 1, 5, 5), 1 * 5 * 5),
        "cb1": uinit(ks[1], (6,), 1 * 5 * 5),
        "cw2": uinit(ks[2], (16, 6, 5, 5), 6 * 5 * 5),
        "cb2": uinit(ks[3], (16,), 6 * 5 * 5),
        "fw1": uinit(ks[4], (120, 400), 400),
        "fb1": uinit(ks[5], (120,), 400),
        "fw2": uinit(ks[6], (84, 120), 120),
        "fb2": uinit(ks[7], (84,), 120),
        "fw3": uinit(ks[8], (10, 84), 84),
        "fb3": uinit(ks[9], (10,), 84),
    }


if __name__ == "__main__":
    key = jax.random.PRNGKey(0)
    k_x, k_p = jax.random.split(key)
    params = init_params(k_p)

    # MNIST-style input (batch=2, 1 channel, 28x28) — required for the 400-wide flatten.
    x = jax.random.normal(k_x, (2, 1, 28, 28), jnp.float32)

    fwd = jax.jit(pseudo_lenet_forward)
    y = jax.block_until_ready(fwd(x, params))
    assert y.shape == (2, 10) and y.dtype == jnp.float32

    y_ref = jax.block_until_ready(pseudo_lenet_reference(x, params))
    # 3e-2 tolerance: MXU inputs are bf16, reference is f32 HIGHEST.
    np.testing.assert_allclose(np.asarray(y), np.asarray(y_ref), rtol=3e-2, atol=3e-2)

    print("KERNEL_OK")
</pallas_src>

<mosaic_0001>
module attributes {stable_mosaic.version = 11 : i64} {
  func.func @pseudo_lenet_kernel(%arg0: memref<16x128xbf16, #tpu.memory_space<vmem>>, %arg1: memref<256x1024xbf16, #tpu.memory_space<vmem>>, %arg2: memref<1x256xf32, #tpu.memory_space<vmem>>, %arg3: memref<768x512xbf16, #tpu.memory_space<vmem>>, %arg4: memref<1x128xf32, #tpu.memory_space<vmem>>, %arg5: memref<640x120xbf16, #tpu.memory_space<vmem>>, %arg6: memref<1x120xf32, #tpu.memory_space<vmem>>, %arg7: memref<120x84xbf16, #tpu.memory_space<vmem>>, %arg8: memref<1x84xf32, #tpu.memory_space<vmem>>, %arg9: memref<84x10xbf16, #tpu.memory_space<vmem>>, %arg10: memref<1x10xf32, #tpu.memory_space<vmem>>, %arg11: memref<2x10xf32, #tpu.memory_space<vmem>>) attributes {dimension_semantics = [], scalar_prefetch = 0 : i64, scratch_operands = 0 : i64, tpu.core_type = #tpu.core_type<tc>} {
    %c0 = arith.constant 0 : index
    %c0_0 = arith.constant 0 : index
    %0 = vector.load %arg0[%c0, %c0_0] : memref<16x128xbf16, #tpu.memory_space<vmem>>, vector<16x128xbf16>
    %1 = vector.extract_strided_slice %0 {offsets = [0, 0], sizes = [14, 128], strides = [1, 1]} : vector<16x128xbf16> to vector<14x128xbf16>
    %2 = vector.extract_strided_slice %0 {offsets = [2, 0], sizes = [14, 128], strides = [1, 1]} : vector<16x128xbf16> to vector<14x128xbf16>
    %3 = tpu.concatenate %1, %2 in 1 : vector<14x128xbf16>, vector<14x128xbf16> -> vector<14x256xbf16>
    %c0_1 = arith.constant 0 : index
    %c0_2 = arith.constant 0 : index
    %4 = vector.load %arg1[%c0_1, %c0_2] : memref<256x1024xbf16, #tpu.memory_space<vmem>>, vector<256x1024xbf16>
    %cst = arith.constant dense<0.000000e+00> : vector<14x1024xf32>
    %5 = tpu.matmul %3, %4, %cst {dimension_numbers = #tpu.dot_dimension_numbers<[1], [0], [0], [1], [0, 0, 1, 1], [], []>} : vector<14x256xbf16>, vector<256x1024xbf16>, vector<14x1024xf32> -> vector<14x1024xf32>
    %6 = vector.extract_strided_slice %5 {offsets = [0, 0], sizes = [14, 256], strides = [1, 1]} : vector<14x1024xf32> to vector<14x256xf32>
    %7 = vector.extract_strided_slice %5 {offsets = [0, 256], sizes = [14, 256], strides = [1, 1]} : vector<14x1024xf32> to vector<14x256xf32>
    %8 = arith.maximumf %6, %7 : vector<14x256xf32>
    %9 = vector.extract_strided_slice %5 {offsets = [0, 512], sizes = [14, 256], strides = [1, 1]} : vector<14x1024xf32> to vector<14x256xf32>
    %10 = vector.extract_strided_slice %5 {offsets = [0, 768], sizes = [14, 256], strides = [1, 1]} : vector<14x1024xf32> to vector<14x256xf32>
    %11 = arith.maximumf %9, %10 : vector<14x256xf32>
    %12 = arith.maximumf %8, %11 : vector<14x256xf32>
    %c0_3 = arith.constant 0 : index
    %c0_4 = arith.constant 0 : index
    %13 = vector.load %arg2[%c0_3, %c0_4] : memref<1x256xf32, #tpu.memory_space<vmem>>, vector<1x256xf32>
    %14 = vector.broadcast %13 : vector<1x256xf32> to vector<14x256xf32>
    %15 = arith.addf %12, %14 : vector<14x256xf32>
    %cst_5 = arith.constant 0.000000e+00 : f32
    %16 = vector.broadcast %cst_5 : f32 to vector<14x256xf32>
    %17 = arith.maximumf %15, %16 : vector<14x256xf32>
    %18 = arith.truncf %17 : vector<14x256xf32> to vector<14x256xbf16>
    %19 = vector.extract_strided_slice %18 {offsets = [0, 0], sizes = [10, 256], strides = [1, 1]} : vector<14x256xbf16> to vector<10x256xbf16>
    %20 = vector.extract_strided_slice %18 {offsets = [2, 0], sizes = [10, 256], strides = [1, 1]} : vector<14x256xbf16> to vector<10x256xbf16>
    %21 = vector.extract_strided_slice %18 {offsets = [4, 0], sizes = [10, 256], strides = [1, 1]} : vector<14x256xbf16> to vector<10x256xbf16>
    %22 = tpu.concatenate %19, %20, %21 in 1 : vector<10x256xbf16>, vector<10x256xbf16>, vector<10x256xbf16> -> vector<10x768xbf16>
    %c0_6 = arith.constant 0 : index
    %c0_7 = arith.constant 0 : index
    %23 = vector.load %arg3[%c0_6, %c0_7] : memref<768x512xbf16, #tpu.memory_space<vmem>>, vector<768x512xbf16>
    %cst_8 = arith.constant dense<0.000000e+00> : vector<10x512xf32>
    %24 = tpu.matmul %22, %23, %cst_8 {dimension_numbers = #tpu.dot_dimension_numbers<[1], [0], [0], [1], [0, 0, 1, 1], [], []>} : vector<10x768xbf16>, vector<768x512xbf16>, vector<10x512xf32> -> vector<10x512xf32>
    %25 = vector.extract_strided_slice %24 {offsets = [0, 0], sizes = [10, 128], strides = [1, 1]} : vector<10x512xf32> to vector<10x128xf32>
    %26 = vector.extract_strided_slice %24 {offsets = [0, 128], sizes = [10, 128], strides = [1, 1]} : vector<10x512xf32> to vector<10x128xf32>
    %27 = arith.maximumf %25, %26 : vector<10x128xf32>
    %28 = vector.extract_strided_slice %24 {offsets = [0, 256], sizes = [10, 128], strides = [1, 1]} : vector<10x512xf32> to vector<10x128xf32>
    %29 = vector.extract_strided_slice %24 {offsets = [0, 384], sizes = [10, 128], strides = [1, 1]} : vector<10x512xf32> to vector<10x128xf32>
    %30 = arith.maximumf %28, %29 : vector<10x128xf32>
    %31 = arith.maximumf %27, %30 : vector<10x128xf32>
    %c0_9 = arith.constant 0 : index
    %c0_10 = arith.constant 0 : index
    %32 = vector.load %arg4[%c0_9, %c0_10] : memref<1x128xf32, #tpu.memory_space<vmem>>, vector<1x128xf32>
    %33 = vector.broadcast %32 : vector<1x128xf32> to vector<10x128xf32>
    %34 = arith.addf %31, %33 : vector<10x128xf32>
    %cst_11 = arith.constant 0.000000e+00 : f32
    %35 = vector.broadcast %cst_11 : f32 to vector<10x128xf32>
    %36 = arith.maximumf %34, %35 : vector<10x128xf32>
    %37 = arith.truncf %36 : vector<10x128xf32> to vector<10x128xbf16>
    %38 = vector.extract_strided_slice %37 {offsets = [0, 0], sizes = [2, 128], strides = [1, 1]} : vector<10x128xbf16> to vector<2x128xbf16>
    %39 = vector.extract_strided_slice %37 {offsets = [2, 0], sizes = [2, 128], strides = [1, 1]} : vector<10x128xbf16> to vector<2x128xbf16>
    %40 = vector.extract_strided_slice %37 {offsets = [4, 0], sizes = [2, 128], strides = [1, 1]} : vector<10x128xbf16> to vector<2x128xbf16>
    %41 = vector.extract_strided_slice %37 {offsets = [6, 0], sizes = [2, 128], strides = [1, 1]} : vector<10x128xbf16> to vector<2x128xbf16>
    %42 = vector.extract_strided_slice %37 {offsets = [8, 0], sizes = [2, 128], strides = [1, 1]} : vector<10x128xbf16> to vector<2x128xbf16>
    %43 = tpu.concatenate %38, %39, %40, %41, %42 in 1 : vector<2x128xbf16>, vector<2x128xbf16>, vector<2x128xbf16>, vector<2x128xbf16>, vector<2x128xbf16> -> vector<2x640xbf16>
    %c0_12 = arith.constant 0 : index
    %c0_13 = arith.constant 0 : index
    %44 = vector.load %arg5[%c0_12, %c0_13] : memref<640x120xbf16, #tpu.memory_space<vmem>>, vector<640x120xbf16>
    %cst_14 = arith.constant dense<0.000000e+00> : vector<2x120xf32>
    %45 = tpu.matmul %43, %44, %cst_14 {dimension_numbers = #tpu.dot_dimension_numbers<[1], [0], [0], [1], [0, 0, 1, 1], [], []>} : vector<2x640xbf16>, vector<640x120xbf16>, vector<2x120xf32> -> vector<2x120xf32>
    %c0_15 = arith.constant 0 : index
    %c0_16 = arith.constant 0 : index
    %46 = vector.load %arg6[%c0_15, %c0_16] : memref<1x120xf32, #tpu.memory_space<vmem>>, vector<1x120xf32>
    %47 = vector.broadcast %46 : vector<1x120xf32> to vector<2x120xf32>
    %48 = arith.addf %45, %47 : vector<2x120xf32>
    %cst_17 = arith.constant 0.000000e+00 : f32
    %49 = vector.broadcast %cst_17 : f32 to vector<2x120xf32>
    %50 = arith.maximumf %48, %49 : vector<2x120xf32>
    %51 = arith.truncf %50 : vector<2x120xf32> to vector<2x120xbf16>
    %c0_18 = arith.constant 0 : index
    %c0_19 = arith.constant 0 : index
    %52 = vector.load %arg7[%c0_18, %c0_19] : memref<120x84xbf16, #tpu.memory_space<vmem>>, vector<120x84xbf16>
    %cst_20 = arith.constant dense<0.000000e+00> : vector<2x84xf32>
    %53 = tpu.matmul %51, %52, %cst_20 {dimension_numbers = #tpu.dot_dimension_numbers<[1], [0], [0], [1], [0, 0, 1, 1], [], []>} : vector<2x120xbf16>, vector<120x84xbf16>, vector<2x84xf32> -> vector<2x84xf32>
    %c0_21 = arith.constant 0 : index
    %c0_22 = arith.constant 0 : index
    %54 = vector.load %arg8[%c0_21, %c0_22] : memref<1x84xf32, #tpu.memory_space<vmem>>, vector<1x84xf32>
    %55 = vector.broadcast %54 : vector<1x84xf32> to vector<2x84xf32>
    %56 = arith.addf %53, %55 : vector<2x84xf32>
    %cst_23 = arith.constant 0.000000e+00 : f32
    %57 = vector.broadcast %cst_23 : f32 to vector<2x84xf32>
    %58 = arith.maximumf %56, %57 : vector<2x84xf32>
    %59 = arith.truncf %58 : vector<2x84xf32> to vector<2x84xbf16>
    %c0_24 = arith.constant 0 : index
    %c0_25 = arith.constant 0 : index
    %60 = vector.load %arg9[%c0_24, %c0_25] : memref<84x10xbf16, #tpu.memory_space<vmem>>, vector<84x10xbf16>
    %cst_26 = arith.constant dense<0.000000e+00> : vector<2x10xf32>
    %61 = tpu.matmul %59, %60, %cst_26 {dimension_numbers = #tpu.dot_dimension_numbers<[1], [0], [0], [1], [0, 0, 1, 1], [], []>} : vector<2x84xbf16>, vector<84x10xbf16>, vector<2x10xf32> -> vector<2x10xf32>
    %c0_27 = arith.constant 0 : index
    %c0_28 = arith.constant 0 : index
    %62 = vector.load %arg10[%c0_27, %c0_28] : memref<1x10xf32, #tpu.memory_space<vmem>>, vector<1x10xf32>
    %63 = vector.broadcast %62 : vector<1x10xf32> to vector<2x10xf32>
    %64 = arith.addf %61, %63 : vector<2x10xf32>
    %cst_29 = arith.constant dense<0xFF800000> : vector<2xf32>
    %65 = vector.multi_reduction <maximumf>, %64, %cst_29 [1] : vector<2x10xf32> to vector<2xf32>
    %66 = vector.shape_cast %65 : vector<2xf32> to vector<2x1xf32>
    %67 = vector.broadcast %66 : vector<2x1xf32> to vector<2x10xf32>
    %68 = arith.subf %64, %67 : vector<2x10xf32>
    %69 = math.exp %68 : vector<2x10xf32>
    %70 = vector.broadcast %66 : vector<2x1xf32> to vector<2x10xf32>
    %71 = arith.subf %64, %70 : vector<2x10xf32>
    %cst_30 = arith.constant dense<0.000000e+00> : vector<2xf32>
    %72 = vector.multi_reduction <add>, %69, %cst_30 [1] : vector<2x10xf32> to vector<2xf32>
    %73 = vector.shape_cast %72 : vector<2xf32> to vector<2x1xf32>
    %74 = math.log %73 : vector<2x1xf32>
    %75 = vector.broadcast %74 : vector<2x1xf32> to vector<2x10xf32>
    %76 = arith.subf %71, %75 : vector<2x10xf32>
    %c0_31 = arith.constant 0 : index
    %c0_32 = arith.constant 0 : index
    %77 = vector.load %arg11[%c0_31, %c0_32] : memref<2x10xf32, #tpu.memory_space<vmem>>, vector<2x10xf32>
    tpu.vector_store %arg11[%c0_31, %c0_32], %76 {strides = array<i32>} : memref<2x10xf32, #tpu.memory_space<vmem>>, vector<2x10xf32>,
    return
  }
}

</mosaic_0001>

<llo_original>
// kernel: pseudo_lenet_forward.1
$region0: #{pseudo_lenet_forward.1}
  #allocation0 [shape = 'u32[]', space=smem, size = 0x4, offset = 0x4, fixed_abs, tag = 'smem constant byte address 0x4 - core index']
  #allocation1 [shape = 'u32[144,128]{1,0:T(1,128)}', space=vmem, size = 0x12000, scoped, tag = 'internal scratch']
  %s0 = inlined_call_operand.vmem [shape: bf16[16,128], index: 0, kind: input, shape index: {}]
  %s1 = inlined_call_operand.vmem [shape: bf16[256,1024], index: 1, kind: input, shape index: {}]
  %s2 = inlined_call_operand.vmem [shape: f32[1,256], index: 2, kind: input, shape index: {}]
  %s3 = inlined_call_operand.vmem [shape: bf16[768,512], index: 3, kind: input, shape index: {}]
  %s4 = inlined_call_operand.vmem [shape: f32[1,128], index: 4, kind: input, shape index: {}]
  %s5 = inlined_call_operand.vmem [shape: bf16[640,120], index: 5, kind: input, shape index: {}]
  %s6 = inlined_call_operand.vmem [shape: f32[1,120], index: 6, kind: input, shape index: {}]
  %s7 = inlined_call_operand.vmem [shape: bf16[120,84], index: 7, kind: input, shape index: {}]
  %s8 = inlined_call_operand.vmem [shape: f32[1,84], index: 8, kind: input, shape index: {}]
  %s9 = inlined_call_operand.vmem [shape: bf16[84,10], index: 9, kind: input, shape index: {}]
  %s10 = inlined_call_operand.vmem [shape: f32[1,10], index: 10, kind: input, shape index: {}]
  %s11 = inlined_call_operand.hbm [shape: f32[2,10], index: 11, kind: output, shape index: {}]
  %s12 = sld [smem:[#allocation0]]
  $region54: #{pseudo_lenet_forward.1} parent=0
    _
  %s14 = ssub.s32 1, %s12
  %s15 = scalar_select 0, %s14, %s12
  $region1: #{pseudo_lenet_forward.1} parent=0
    #allocation2 [shape = 'u8[1024]{0}', space=vmem, size = 0x400, scoped, tag = 'output window, operand 0, single buffered']
    #allocation3 [shape = 's32[1]{0}', space=sflag, size = 0x4, scoped, tag = 'scoped memory for pseudo_lenet_forward.1']
    %16 = vsyncpa [#allocation3], 0
    // Predicated region
    $region2: #{pseudo_lenet_forward.1} parent=1 // pred_check
      _
    $region3: #{pseudo_lenet_forward.1} parent=1 // pred_check_branch
      %18 = sbr.rel (0) target = $region5
    $region4: #{pseudo_lenet_forward.1} parent=1 // pred_region
      _
    $region5: #{pseudo_lenet_forward.1} parent=1 // pred_fallthru
      _
    // Predicated region
    $region6: #{pseudo_lenet_forward.1} parent=1 // pred_check
      _
    $region7: #{pseudo_lenet_forward.1} parent=1 // pred_check_branch
      %20 = sbr.rel (0) target = $region9
    $region8: #{pseudo_lenet_forward.1} parent=1 // pred_region
      _
    $region9: #{pseudo_lenet_forward.1} parent=1 // pred_fallthru
      _
    // Predicated region
    $region10: #{pseudo_lenet_forward.1} parent=1 // pred_check
      _
    $region11: #{pseudo_lenet_forward.1} parent=1 // pred_check_branch
      %22 = sbr.rel (0) target = $region13
    $region12: #{pseudo_lenet_forward.1} parent=1 // pred_region
      _
    $region13: #{pseudo_lenet_forward.1} parent=1 // pred_fallthru
      _
    // Predicated region
    $region14: #{pseudo_lenet_forward.1} parent=1 // pred_check
      _
    $region15: #{pseudo_lenet_forward.1} parent=1 // pred_check_branch
      %24 = sbr.rel (0) target = $region17
    $region16: #{pseudo_lenet_forward.1} parent=1 // pred_region
      _
    $region17: #{pseudo_lenet_forward.1} parent=1 // pred_fallthru
      _
    // Predicated region
    $region18: #{pseudo_lenet_forward.1} parent=1 // pred_check
      _
    $region19: #{pseudo_lenet_forward.1} parent=1 // pred_check_branch
      %26 = sbr.rel (0) target = $region21
    $region20: #{pseudo_lenet_forward.1} parent=1 // pred_region
      _
    $region21: #{pseudo_lenet_forward.1} parent=1 // pred_fallthru
      _
    // Predicated region
    $region22: #{pseudo_lenet_forward.1} parent=1 // pred_check
      _
    $region23: #{pseudo_lenet_forward.1} parent=1 // pred_check_branch
      %28 = sbr.rel (0) target = $region25
    $region24: #{pseudo_lenet_forward.1} parent=1 // pred_region
      _
    $region25: #{pseudo_lenet_forward.1} parent=1 // pred_fallthru
      _
    // Predicated region
    $region26: #{pseudo_lenet_forward.1} parent=1 // pred_check
      _
    $region27: #{pseudo_lenet_forward.1} parent=1 // pred_check_branch
      %30 = sbr.rel (0) target = $region29
    $region28: #{pseudo_lenet_forward.1} parent=1 // pred_region
      _
    $region29: #{pseudo_lenet_forward.1} parent=1 // pred_fallthru
      _
    // Predicated region
    $region30: #{pseudo_lenet_forward.1} parent=1 // pred_check
      _
    $region31: #{pseudo_lenet_forward.1} parent=1 // pred_check_branch
      %32 = sbr.rel (0) target = $region33
    $region32: #{pseudo_lenet_forward.1} parent=1 // pred_region
      _
    $region33: #{pseudo_lenet_forward.1} parent=1 // pred_fallthru
      _
    // Predicated region
    $region34: #{pseudo_lenet_forward.1} parent=1 // pred_check
      _
    $region35: #{pseudo_lenet_forward.1} parent=1 // pred_check_branch
      %34 = sbr.rel (0) target = $region37
    $region36: #{pseudo_lenet_forward.1} parent=1 // pred_region
      _
    $region37: #{pseudo_lenet_forward.1} parent=1 // pred_fallthru
      _
    // Predicated region
    $region38: #{pseudo_lenet_forward.1} parent=1 // pred_check
      _
    $region39: #{pseudo_lenet_forward.1} parent=1 // pred_check_branch
      %36 = sbr.rel (0) target = $region41
    $region40: #{pseudo_lenet_forward.1} parent=1 // pred_region
      _
    $region41: #{pseudo_lenet_forward.1} parent=1 // pred_fallthru
      _
    // Predicated region
    $region42: #{pseudo_lenet_forward.1} parent=1 // pred_check
      _
    $region43: #{pseudo_lenet_forward.1} parent=1 // pred_check_branch
      %38 = sbr.rel (0) target = $region45
    $region44: #{pseudo_lenet_forward.1} parent=1 // pred_region
      _
    $region45: #{pseudo_lenet_forward.1} parent=1 // pred_fallthru
      _
    %v40 = vld [vmem:[%s0] sm:$0xf]
    %v41 = vld [vmem:[%s0 + $0x4] sm:$0xf]
    %v44 = vunpack.c.l.b16 %v40
    %v45 = vunpack.c.l.b16 %v41
    %v46 = vpack.c.b16 %v45, %v44
    %v48 = vrot.slane %v46, 1
    %v50 = vld [vmem:[%s1] sm:$0xff]
    %v51 = vld [vmem:[%s1 + $0x8] sm:$0xff]
    %v52 = vld [vmem:[%s1 + $0x10] sm:$0xff]
    %v53 = vld [vmem:[%s1 + $0x18] sm:$0xff]
    %v54 = vld [vmem:[%s1 + $0x20] sm:$0xff]
    %v55 = vld [vmem:[%s1 + $0x28] sm:$0xff]
    %v56 = vld [vmem:[%s1 + $0x30] sm:$0xff]
    %v57 = vld [vmem:[%s1 + $0x38] sm:$0xff]
    %v58 = vld [vmem:[%s1 + $0x40] sm:$0xff]
    %v59 = vld [vmem:[%s1 + $0x48] sm:$0xff]
    %v60 = vld [vmem:[%s1 + $0x50] sm:$0xff]
    %v61 = vld [vmem:[%s1 + $0x58] sm:$0xff]
    %v62 = vld [vmem:[%s1 + $0x60] sm:$0xff]
    %v63 = vld [vmem:[%s1 + $0x68] sm:$0xff]
    %v64 = vld [vmem:[%s1 + $0x70] sm:$0xff]
    %v65 = vld [vmem:[%s1 + $0x78] sm:$0xff]
    %v66 = vld [vmem:[%s1 + $0x80] sm:$0xff]
    %v67 = vld [vmem:[%s1 + $0x88] sm:$0xff]
    %v68 = vld [vmem:[%s1 + $0x90] sm:$0xff]
    %v69 = vld [vmem:[%s1 + $0x98] sm:$0xff]
    %v70 = vld [vmem:[%s1 + $0xa0] sm:$0xff]
    %v71 = vld [vmem:[%s1 + $0xa8] sm:$0xff]
    %v72 = vld [vmem:[%s1 + $0xb0] sm:$0xff]
    %v73 = vld [vmem:[%s1 + $0xb8] sm:$0xff]
    %v74 = vld [vmem:[%s1 + $0xc0] sm:$0xff]
    %v75 = vld [vmem:[%s1 + $0xc8] sm:$0xff]
    %v76 = vld [vmem:[%s1 + $0xd0] sm:$0xff]
    %v77 = vld [vmem:[%s1 + $0xd8] sm:$0xff]
    %v78 = vld [vmem:[%s1 + $0xe0] sm:$0xff]
    %v79 = vld [vmem:[%s1 + $0xe8] sm:$0xff]
    %v80 = vld [vmem:[%s1 + $0xf0] sm:$0xff]
    %v81 = vld [vmem:[%s1 + $0xf8] sm:$0xff]
    %v82 = vld [vmem:[%s1 + $0x100] sm:$0xff]
    %v83 = vld [vmem:[%s1 + $0x108] sm:$0xff]
    %v84 = vld [vmem:[%s1 + $0x110] sm:$0xff]
    %v85 = vld [vmem:[%s1 + $0x118] sm:$0xff]
    %v86 = vld [vmem:[%s1 + $0x120] sm:$0xff]
    %v87 = vld [vmem:[%s1 + $0x128] sm:$0xff]
    %v88 = vld [vmem:[%s1 + $0x130] sm:$0xff]
    %v89 = vld [vmem:[%s1 + $0x138] sm:$0xff]
    %v90 = vld [vmem:[%s1 + $0x140] sm:$0xff]
    %v91 = vld [vmem:[%s1 + $0x148] sm:$0xff]
    %v92 = vld [vmem:[%s1 + $0x150] sm:$0xff]
    %v93 = vld [vmem:[%s1 + $0x158] sm:$0xff]
    %v94 = vld [vmem:[%s1 + $0x160] sm:$0xff]
    %v95 = vld [vmem:[%s1 + $0x168] sm:$0xff]
    %v96 = vld [vmem:[%s1 + $0x170] sm:$0xff]
    %v97 = vld [vmem:[%s1 + $0x178] sm:$0xff]
    %v98 = vld [vmem:[%s1 + $0x180] sm:$0xff]
    %v99 = vld [vmem:[%s1 + $0x188] sm:$0xff]
    %v100 = vld [vmem:[%s1 + $0x190] sm:$0xff]
    %v101 = vld [vmem:[%s1 + $0x198] sm:$0xff]
    %v102 = vld [vmem:[%s1 + $0x1a0] sm:$0xff]
    %v103 = vld [vmem:[%s1 + $0x1a8] sm:$0xff]
    %v104 = vld [vmem:[%s1 + $0x1b0] sm:$0xff]
    %v105 = vld [vmem:[%s1 + $0x1b8] sm:$0xff]
    %v106 = vld [vmem:[%s1 + $0x1c0] sm:$0xff]
    %v107 = vld [vmem:[%s1 + $0x1c8] sm:$0xff]
    %v108 = vld [vmem:[%s1 + $0x1d0] sm:$0xff]
    %v109 = vld [vmem:[%s1 + $0x1d8] sm:$0xff]
    %v110 = vld [vmem:[%s1 + $0x1e0] sm:$0xff]
    %v111 = vld [vmem:[%s1 + $0x1e8] sm:$0xff]
    %v112 = vld [vmem:[%s1 + $0x1f0] sm:$0xff]
    %v113 = vld [vmem:[%s1 + $0x1f8] sm:$0xff]
    %v114 = vld [vmem:[%s1 + $0x200] sm:$0xff]
    %v115 = vld [vmem:[%s1 + $0x208] sm:$0xff]
    %v116 = vld [vmem:[%s1 + $0x210] sm:$0xff]
    %v117 = vld [vmem:[%s1 + $0x218] sm:$0xff]
    %v118 = vld [vmem:[%s1 + $0x220] sm:$0xff]
    %v119 = vld [vmem:[%s1 + $0x228] sm:$0xff]
    %v120 = vld [vmem:[%s1 + $0x230] sm:$0xff]
    %v121 = vld [vmem:[%s1 + $0x238] sm:$0xff]
    %v122 = vld [vmem:[%s1 + $0x240] sm:$0xff]
    %v123 = vld [vmem:[%s1 + $0x248] sm:$0xff]
    %v124 = vld [vmem:[%s1 + $0x250] sm:$0xff]
    %v125 = vld [vmem:[%s1 + $0x258] sm:$0xff]
    %v126 = vld [vmem:[%s1 + $0x260] sm:$0xff]
    %v127 = vld [vmem:[%s1 + $0x268] sm:$0xff]
    %v128 = vld [vmem:[%s1 + $0x270] sm:$0xff]
    %v129 = vld [vmem:[%s1 + $0x278] sm:$0xff]
    %v130 = vld [vmem:[%s1 + $0x280] sm:$0xff]
    %v131 = vld [vmem:[%s1 + $0x288] sm:$0xff]
    %v132 = vld [vmem:[%s1 + $0x290] sm:$0xff]
    %v133 = vld [vmem:[%s1 + $0x298] sm:$0xff]
    %v134 = vld [vmem:[%s1 + $0x2a0] sm:$0xff]
    %v135 = vld [vmem:[%s1 + $0x2a8] sm:$0xff]
    %v136 = vld [vmem:[%s1 + $0x2b0] sm:$0xff]
    %v137 = vld [vmem:[%s1 + $0x2b8] sm:$0xff]
    %v138 = vld [vmem:[%s1 + $0x2c0] sm:$0xff]
    %v139 = vld [vmem:[%s1 + $0x2c8] sm:$0xff]
    %v140 = vld [vmem:[%s1 + $0x2d0] sm:$0xff]
    %v141 = vld [vmem:[%s1 + $0x2d8] sm:$0xff]
    %v142 = vld [vmem:[%s1 + $0x2e0] sm:$0xff]
    %v143 = vld [vmem:[%s1 + $0x2e8] sm:$0xff]
    %v144 = vld [vmem:[%s1 + $0x2f0] sm:$0xff]
    %v145 = vld [vmem:[%s1 + $0x2f8] sm:$0xff]
    %v146 = vld [vmem:[%s1 + $0x300] sm:$0xff]
    %v147 = vld [vmem:[%s1 + $0x308] sm:$0xff]
    %v148 = vld [vmem:[%s1 + $0x310] sm:$0xff]
    %v149 = vld [vmem:[%s1 + $0x318] sm:$0xff]
    %v150 = vld [vmem:[%s1 + $0x320] sm:$0xff]
    %v151 = vld [vmem:[%s1 + $0x328] sm:$0xff]
    %v152 = vld [vmem:[%s1 + $0x330] sm:$0xff]
    %v153 = vld [vmem:[%s1 + $0x338] sm:$0xff]
    %v154 = vld [vmem:[%s1 + $0x340] sm:$0xff]
    %v155 = vld [vmem:[%s1 + $0x348] sm:$0xff]
    %v156 = vld [vmem:[%s1 + $0x350] sm:$0xff]
    %v157 = vld [vmem:[%s1 + $0x358] sm:$0xff]
    %v158 = vld [vmem:[%s1 + $0x360] sm:$0xff]
    %v159 = vld [vmem:[%s1 + $0x368] sm:$0xff]
    %v160 = vld [vmem:[%s1 + $0x370] sm:$0xff]
    %v161 = vld [vmem:[%s1 + $0x378] sm:$0xff]
    %v162 = vld [vmem:[%s1 + $0x380] sm:$0xff]
    %v163 = vld [vmem:[%s1 + $0x388] sm:$0xff]
    %v164 = vld [vmem:[%s1 + $0x390] sm:$0xff]
    %v165 = vld [vmem:[%s1 + $0x398] sm:$0xff]
    %v166 = vld [vmem:[%s1 + $0x3a0] sm:$0xff]
    %v167 = vld [vmem:[%s1 + $0x3a8] sm:$0xff]
    %v168 = vld [vmem:[%s1 + $0x3b0] sm:$0xff]
    %v169 = vld [vmem:[%s1 + $0x3b8] sm:$0xff]
    %v170 = vld [vmem:[%s1 + $0x3c0] sm:$0xff]
    %v171 = vld [vmem:[%s1 + $0x3c8] sm:$0xff]
    %v172 = vld [vmem:[%s1 + $0x3d0] sm:$0xff]
    %v173 = vld [vmem:[%s1 + $0x3d8] sm:$0xff]
    %v174 = vld [vmem:[%s1 + $0x3e0] sm:$0xff]
    %v175 = vld [vmem:[%s1 + $0x3e8] sm:$0xff]
    %v176 = vld [vmem:[%s1 + $0x3f0] sm:$0xff]
    %v177 = vld [vmem:[%s1 + $0x3f8] sm:$0xff]
    %v306 = vunpack.c.l.b16 %v50
    %v307 = vunpack.c.h.b16 %v50
    %v308 = vunpack.c.l.b16 %v51
    %v309 = vunpack.c.h.b16 %v51
    %v310 = vunpack.c.l.b16 %v52
    %v311 = vunpack.c.h.b16 %v52
    %v312 = vunpack.c.l.b16 %v53
    %v313 = vunpack.c.h.b16 %v53
    %v314 = vunpack.c.l.b16 %v54
    %v315 = vunpack.c.h.b16 %v54
    %v316 = vunpack.c.l.b16 %v55
    %v317 = vunpack.c.h.b16 %v55
    %v318 = vunpack.c.l.b16 %v56
    %v319 = vunpack.c.h.b16 %v56
    %v320 = vunpack.c.l.b16 %v57
    %v321 = vunpack.c.h.b16 %v57
    %v322 = vunpack.c.l.b16 %v58
    %v323 = vunpack.c.h.b16 %v58
    %v324 = vunpack.c.l.b16 %v59
    %v325 = vunpack.c.h.b16 %v59
    %v326 = vunpack.c.l.b16 %v60
    %v327 = vunpack.c.h.b16 %v60
    %v328 = vunpack.c.l.b16 %v61
    %v329 = vunpack.c.h.b16 %v61
    %v330 = vunpack.c.l.b16 %v62
    %v331 = vunpack.c.h.b16 %v62
    %v332 = vunpack.c.l.b16 %v63
    %v333 = vunpack.c.h.b16 %v63
    %v334 = vunpack.c.l.b16 %v64
    %v335 = vunpack.c.h.b16 %v64
    %v336 = vunpack.c.l.b16 %v65
    %v337 = vunpack.c.h.b16 %v65
    %v338 = vunpack.c.l.b16 %v66
    %v339 = vunpack.c.h.b16 %v66
    %v340 = vunpack.c.l.b16 %v67
    %v341 = vunpack.c.h.b16 %v67
    %v342 = vunpack.c.l.b16 %v68
    %v343 = vunpack.c.h.b16 %v68
    %v344 = vunpack.c.l.b16 %v69
    %v345 = vunpack.c.h.b16 %v69
    %v346 = vunpack.c.l.b16 %v70
    %v347 = vunpack.c.h.b16 %v70
    %v348 = vunpack.c.l.b16 %v71
    %v349 = vunpack.c.h.b16 %v71
    %v350 = vunpack.c.l.b16 %v72
    %v351 = vunpack.c.h.b16 %v72
    %v352 = vunpack.c.l.b16 %v73
    %v353 = vunpack.c.h.b16 %v73
    %v354 = vunpack.c.l.b16 %v74
    %v355 = vunpack.c.h.b16 %v74
    %v356 = vunpack.c.l.b16 %v75
    %v357 = vunpack.c.h.b16 %v75
    %v358 = vunpack.c.l.b16 %v76
    %v359 = vunpack.c.h.b16 %v76
    %v360 = vunpack.c.l.b16 %v77
    %v361 = vunpack.c.h.b16 %v77
    %v362 = vunpack.c.l.b16 %v78
    %v363 = vunpack.c.h.b16 %v78
    %v364 = vunpack.c.l.b16 %v79
    %v365 = vunpack.c.h.b16 %v79
    %v366 = vunpack.c.l.b16 %v80
    %v367 = vunpack.c.h.b16 %v80
    %v368 = vunpack.c.l.b16 %v81
    %v369 = vunpack.c.h.b16 %v81
    %v370 = vunpack.c.l.b16 %v82
    %v371 = vunpack.c.h.b16 %v82
    %v372 = vunpack.c.l.b16 %v83
    %v373 = vunpack.c.h.b16 %v83
    %v374 = vunpack.c.l.b16 %v84
    %v375 = vunpack.c.h.b16 %v84
    %v376 = vunpack.c.l.b16 %v85
    %v377 = vunpack.c.h.b16 %v85
    %v378 = vunpack.c.l.b16 %v86
    %v379 = vunpack.c.h.b16 %v86
    %v380 = vunpack.c.l.b16 %v87
    %v381 = vunpack.c.h.b16 %v87
    %v382 = vunpack.c.l.b16 %v88
    %v383 = vunpack.c.h.b16 %v88
    %v384 = vunpack.c.l.b16 %v89
    %v385 = vunpack.c.h.b16 %v89
    %v386 = vunpack.c.l.b16 %v90
    %v387 = vunpack.c.h.b16 %v90
    %v388 = vunpack.c.l.b16 %v91
    %v389 = vunpack.c.h.b16 %v91
    %v390 = vunpack.c.l.b16 %v92
    %v391 = vunpack.c.h.b16 %v92
    %v392 = vunpack.c.l.b16 %v93
    %v393 = vunpack.c.h.b16 %v93
    %v394 = vunpack.c.l.b16 %v94
    %v395 = vunpack.c.h.b16 %v94
    %v396 = vunpack.c.l.b16 %v95
    %v397 = vunpack.c.h.b16 %v95
    %v398 = vunpack.c.l.b16 %v96
    %v399 = vunpack.c.h.b16 %v96
    %v400 = vunpack.c.l.b16 %v97
    %v401 = vunpack.c.h.b16 %v97
    %v402 = vunpack.c.l.b16 %v98
    %v403 = vunpack.c.h.b16 %v98
    %v404 = vunpack.c.l.b16 %v99
    %v405 = vunpack.c.h.b16 %v99
    %v406 = vunpack.c.l.b16 %v100
    %v407 = vunpack.c.h.b16 %v100
    %v408 = vunpack.c.l.b16 %v101
    %v409 = vunpack.c.h.b16 %v101
    %v410 = vunpack.c.l.b16 %v102
    %v411 = vunpack.c.h.b16 %v102
    %v412 = vunpack.c.l.b16 %v103
    %v413 = vunpack.c.h.b16 %v103
    %v414 = vunpack.c.l.b16 %v104
    %v415 = vunpack.c.h.b16 %v104
    %v416 = vunpack.c.l.b16 %v105
    %v417 = vunpack.c.h.b16 %v105
    %v418 = vunpack.c.l.b16 %v106
    %v419 = vunpack.c.h.b16 %v106
    %v420 = vunpack.c.l.b16 %v107
    %v421 = vunpack.c.h.b16 %v107
    %v422 = vunpack.c.l.b16 %v108
    %v423 = vunpack.c.h.b16 %v108
    %v424 = vunpack.c.l.b16 %v109
    %v425 = vunpack.c.h.b16 %v109
    %v426 = vunpack.c.l.b16 %v110
    %v427 = vunpack.c.h.b16 %v110
    %v428 = vunpack.c.l.b16 %v111
    %v429 = vunpack.c.h.b16 %v111
    %v430 = vunpack.c.l.b16 %v112
    %v431 = vunpack.c.h.b16 %v112
    %v432 = vunpack.c.l.b16 %v113
    %v433 = vunpack.c.h.b16 %v113
    %v434 = vunpack.c.l.b16 %v114
    %v435 = vunpack.c.h.b16 %v114
    %v436 = vunpack.c.l.b16 %v115
    %v437 = vunpack.c.h.b16 %v115
    %v438 = vunpack.c.l.b16 %v116
    %v439 = vunpack.c.h.b16 %v116
    %v440 = vunpack.c.l.b16 %v117
    %v441 = vunpack.c.h.b16 %v117
    %v442 = vunpack.c.l.b16 %v118
    %v443 = vunpack.c.h.b16 %v118
    %v444 = vunpack.c.l.b16 %v119
    %v445 = vunpack.c.h.b16 %v119
    %v446 = vunpack.c.l.b16 %v120
    %v447 = vunpack.c.h.b16 %v120
    %v448 = vunpack.c.l.b16 %v121
    %v449 = vunpack.c.h.b16 %v121
    %v450 = vunpack.c.l.b16 %v122
    %v451 = vunpack.c.h.b16 %v122
    %v452 = vunpack.c.l.b16 %v123
    %v453 = vunpack.c.h.b16 %v123
    %v454 = vunpack.c.l.b16 %v124
    %v455 = vunpack.c.h.b16 %v124
    %v456 = vunpack.c.l.b16 %v125
    %v457 = vunpack.c.h.b16 %v125
    %v458 = vunpack.c.l.b16 %v126
    %v459 = vunpack.c.h.b16 %v126
    %v460 = vunpack.c.l.b16 %v127
    %v461 = vunpack.c.h.b16 %v127
    %v462 = vunpack.c.l.b16 %v128
    %v463 = vunpack.c.h.b16 %v128
    %v464 = vunpack.c.l.b16 %v129
    %v465 = vunpack.c.h.b16 %v129
    %v466 = vunpack.c.l.b16 %v130
    %v467 = vunpack.c.h.b16 %v130
    %v468 = vunpack.c.l.b16 %v131
    %v469 = vunpack.c.h.b16 %v131
    %v470 = vunpack.c.l.b16 %v132
    %v471 = vunpack.c.h.b16 %v132
    %v472 = vunpack.c.l.b16 %v133
    %v473 = vunpack.c.h.b16 %v133
    %v474 = vunpack.c.l.b16 %v134
    %v475 = vunpack.c.h.b16 %v134
    %v476 = vunpack.c.l.b16 %v135
    %v477 = vunpack.c.h.b16 %v135
    %v478 = vunpack.c.l.b16 %v136
    %v479 = vunpack.c.h.b16 %v136
    %v480 = vunpack.c.l.b16 %v137
    %v481 = vunpack.c.h.b16 %v137
    %v482 = vunpack.c.l.b16 %v138
    %v483 = vunpack.c.h.b16 %v138
    %v484 = vunpack.c.l.b16 %v139
    %v485 = vunpack.c.h.b16 %v139
    %v486 = vunpack.c.l.b16 %v140
    %v487 = vunpack.c.h.b16 %v140
    %v488 = vunpack.c.l.b16 %v141
    %v489 = vunpack.c.h.b16 %v141
    %v490 = vunpack.c.l.b16 %v142
    %v491 = vunpack.c.h.b16 %v142
    %v492 = vunpack.c.l.b16 %v143
    %v493 = vunpack.c.h.b16 %v143
    %v494 = vunpack.c.l.b16 %v144
    %v495 = vunpack.c.h.b16 %v144
    %v496 = vunpack.c.l.b16 %v145
    %v497 = vunpack.c.h.b16 %v145
    %v498 = vunpack.c.l.b16 %v146
    %v499 = vunpack.c.h.b16 %v146
    %v500 = vunpack.c.l.b16 %v147
    %v501 = vunpack.c.h.b16 %v147
    %v502 = vunpack.c.l.b16 %v148
    %v503 = vunpack.c.h.b16 %v148
    %v504 = vunpack.c.l.b16 %v149
    %v505 = vunpack.c.h.b16 %v149
    %v506 = vunpack.c.l.b16 %v150
    %v507 = vunpack.c.h.b16 %v150
    %v508 = vunpack.c.l.b16 %v151
    %v509 = vunpack.c.h.b16 %v151
    %v510 = vunpack.c.l.b16 %v152
    %v511 = vunpack.c.h.b16 %v152
    %v512 = vunpack.c.l.b16 %v153
    %v513 = vunpack.c.h.b16 %v153
    %v514 = vunpack.c.l.b16 %v154
    %v515 = vunpack.c.h.b16 %v154
    %v516 = vunpack.c.l.b16 %v155
    %v517 = vunpack.c.h.b16 %v155
    %v518 = vunpack.c.l.b16 %v156
    %v519 = vunpack.c.h.b16 %v156
    %v520 = vunpack.c.l.b16 %v157
    %v521 = vunpack.c.h.b16 %v157
    %v522 = vunpack.c.l.b16 %v158
    %v523 = vunpack.c.h.b16 %v158
    %v524 = vunpack.c.l.b16 %v159
    %v525 = vunpack.c.h.b16 %v159
    %v526 = vunpack.c.l.b16 %v160
    %v527 = vunpack.c.h.b16 %v160
    %v528 = vunpack.c.l.b16 %v161
    %v529 = vunpack.c.h.b16 %v161
    %v530 = vunpack.c.l.b16 %v162
    %v531 = vunpack.c.h.b16 %v162
    %v532 = vunpack.c.l.b16 %v163
    %v533 = vunpack.c.h.b16 %v163
    %v534 = vunpack.c.l.b16 %v164
    %v535 = vunpack.c.h.b16 %v164
    %v536 = vunpack.c.l.b16 %v165
    %v537 = vunpack.c.h.b16 %v165
    %v538 = vunpack.c.l.b16 %v166
    %v539 = vunpack.c.h.b16 %v166
    %v540 = vunpack.c.l.b16 %v167
    %v541 = vunpack.c.h.b16 %v167
    %v542 = vunpack.c.l.b16 %v168
    %v543 = vunpack.c.h.b16 %v168
    %v544 = vunpack.c.l.b16 %v169
    %v545 = vunpack.c.h.b16 %v169
    %v546 = vunpack.c.l.b16 %v170
    %v547 = vunpack.c.h.b16 %v170
    %v548 = vunpack.c.l.b16 %v171
    %v549 = vunpack.c.h.b16 %v171
    %v550 = vunpack.c.l.b16 %v172
    %v551 = vunpack.c.h.b16 %v172
    %v552 = vunpack.c.l.b16 %v173
    %v553 = vunpack.c.h.b16 %v173
    %v554 = vunpack.c.l.b16 %v174
    %v555 = vunpack.c.h.b16 %v174
    %v556 = vunpack.c.l.b16 %v175
    %v557 = vunpack.c.h.b16 %v175
    %v558 = vunpack.c.l.b16 %v176
    %v559 = vunpack.c.h.b16 %v176
    %v560 = vunpack.c.l.b16 %v177
    %v561 = vunpack.c.h.b16 %v177
    %v562 = vpack.c.b16 %v314, %v306
    %v563 = vpack.c.b16 %v315, %v307
    %v564 = vpack.c.b16 %v316, %v308
    %v565 = vpack.c.b16 %v317, %v309
    %v566 = vpack.c.b16 %v318, %v310
    %v567 = vpack.c.b16 %v319, %v311
    %v568 = vpack.c.b16 %v320, %v312
    %v569 = vpack.c.b16 %v321, %v313
    %v570 = vpack.c.b16 %v330, %v322
    %v571 = vpack.c.b16 %v331, %v323
    %v572 = vpack.c.b16 %v332, %v324
    %v573 = vpack.c.b16 %v333, %v325
    %v574 = vpack.c.b16 %v334, %v326
    %v575 = vpack.c.b16 %v335, %v327
    %v576 = vpack.c.b16 %v336, %v328
    %v577 = vpack.c.b16 %v337, %v329
    %v578 = vpack.c.b16 %v346, %v338
    %v579 = vpack.c.b16 %v347, %v339
    %v580 = vpack.c.b16 %v348, %v340
    %v581 = vpack.c.b16 %v349, %v341
    %v582 = vpack.c.b16 %v350, %v342
    %v583 = vpack.c.b16 %v351, %v343
    %v584 = vpack.c.b16 %v352, %v344
    %v585 = vpack.c.b16 %v353, %v345
    %v586 = vpack.c.b16 %v362, %v354
    %v587 = vpack.c.b16 %v363, %v355
    %v588 = vpack.c.b16 %v364, %v356
    %v589 = vpack.c.b16 %v365, %v357
    %v590 = vpack.c.b16 %v366, %v358
    %v591 = vpack.c.b16 %v367, %v359
    %v592 = vpack.c.b16 %v368, %v360
    %v593 = vpack.c.b16 %v369, %v361
    %v594 = vpack.c.b16 %v378, %v370
    %v595 = vpack.c.b16 %v379, %v371
    %v596 = vpack.c.b16 %v380, %v372
    %v597 = vpack.c.b16 %v381, %v373
    %v598 = vpack.c.b16 %v382, %v374
    %v599 = vpack.c.b16 %v383, %v375
    %v600 = vpack.c.b16 %v384, %v376
    %v601 = vpack.c.b16 %v385, %v377
    %v602 = vpack.c.b16 %v394, %v386
    %v603 = vpack.c.b16 %v395, %v387
    %v604 = vpack.c.b16 %v396, %v388
    %v605 = vpack.c.b16 %v397, %v389
    %v606 = vpack.c.b16 %v398, %v390
    %v607 = vpack.c.b16 %v399, %v391
    %v608 = vpack.c.b16 %v400, %v392
    %v609 = vpack.c.b16 %v401, %v393
    %v610 = vpack.c.b16 %v410, %v402
    %v611 = vpack.c.b16 %v411, %v403
    %v612 = vpack.c.b16 %v412, %v404
    %v613 = vpack.c.b16 %v413, %v405
    %v614 = vpack.c.b16 %v414, %v406
    %v615 = vpack.c.b16 %v415, %v407
    %v616 = vpack.c.b16 %v416, %v408
    %v617 = vpack.c.b16 %v417, %v409
    %v618 = vpack.c.b16 %v426, %v418
    %v619 = vpack.c.b16 %v427, %v419
    %v620 = vpack.c.b16 %v428, %v420
    %v621 = vpack.c.b16 %v429, %v421
    %v622 = vpack.c.b16 %v430, %v422
    %v623 = vpack.c.b16 %v431, %v423
    %v624 = vpack.c.b16 %v432, %v424
    %v625 = vpack.c.b16 %v433, %v425
    %v626 = vpack.c.b16 %v442, %v434
    %v627 = vpack.c.b16 %v443, %v435
    %v628 = vpack.c.b16 %v444, %v436
    %v629 = vpack.c.b16 %v445, %v437
    %v630 = vpack.c.b16 %v446, %v438
    %v631 = vpack.c.b16 %v447, %v439
    %v632 = vpack.c.b16 %v448, %v440
    %v633 = vpack.c.b16 %v449, %v441
    %v634 = vpack.c.b16 %v458, %v450
    %v635 = vpack.c.b16 %v459, %v451
    %v636 = vpack.c.b16 %v460, %v452
    %v637 = vpack.c.b16 %v461, %v453
    %v638 = vpack.c.b16 %v462, %v454
    %v639 = vpack.c.b16 %v463, %v455
    %v640 = vpack.c.b16 %v464, %v456
    %v641 = vpack.c.b16 %v465, %v457
    %v642 = vpack.c.b16 %v474, %v466
    %v643 = vpack.c.b16 %v475, %v467
    %v644 = vpack.c.b16 %v476, %v468
    %v645 = vpack.c.b16 %v477, %v469
    %v646 = vpack.c.b16 %v478, %v470
    %v647 = vpack.c.b16 %v479, %v471
    %v648 = vpack.c.b16 %v480, %v472
    %v649 = vpack.c.b16 %v481, %v473
    %v650 = vpack.c.b16 %v490, %v482
    %v651 = vpack.c.b16 %v491, %v483
    %v652 = vpack.c.b16 %v492, %v484
    %v653 = vpack.c.b16 %v493, %v485
    %v654 = vpack.c.b16 %v494, %v486
    %v655 = vpack.c.b16 %v495, %v487
    %v656 = vpack.c.b16 %v496, %v488
    %v657 = vpack.c.b16 %v497, %v489
    %v658 = vpack.c.b16 %v506, %v498
    %v659 = vpack.c.b16 %v507, %v499
    %v660 = vpack.c.b16 %v508, %v500
    %v661 = vpack.c.b16 %v509, %v501
    %v662 = vpack.c.b16 %v510, %v502
    %v663 = vpack.c.b16 %v511, %v503
    %v664 = vpack.c.b16 %v512, %v504
    %v665 = vpack.c.b16 %v513, %v505
    %v666 = vpack.c.b16 %v522, %v514
    %v667 = vpack.c.b16 %v523, %v515
    %v668 = vpack.c.b16 %v524, %v516
    %v669 = vpack.c.b16 %v525, %v517
    %v670 = vpack.c.b16 %v526, %v518
    %v671 = vpack.c.b16 %v527, %v519
    %v672 = vpack.c.b16 %v528, %v520
    %v673 = vpack.c.b16 %v529, %v521
    %v674 = vpack.c.b16 %v538, %v530
    %v675 = vpack.c.b16 %v539, %v531
    %v676 = vpack.c.b16 %v540, %v532
    %v677 = vpack.c.b16 %v541, %v533
    %v678 = vpack.c.b16 %v542, %v534
    %v679 = vpack.c.b16 %v543, %v535
    %v680 = vpack.c.b16 %v544, %v536
    %v681 = vpack.c.b16 %v545, %v537
    %v682 = vpack.c.b16 %v554, %v546
    %v683 = vpack.c.b16 %v555, %v547
    %v684 = vpack.c.b16 %v556, %v548
    %v685 = vpack.c.b16 %v557, %v549
    %v686 = vpack.c.b16 %v558, %v550
    %v687 = vpack.c.b16 %v559, %v551
    %v688 = vpack.c.b16 %v560, %v552
    %v689 = vpack.c.b16 %v561, %v553
    %818 = vmatprep.subr.bf16.mxu0 %v563
    %819 = vmatpush1.bf16.msra.mxu0 %v562
    %820 = vmatprep.subr.bf16.mxu0 %v571
    %821 = vmatpush1.bf16.msra.mxu0 %v570
    %822 = vmatprep.subr.bf16.mxu0 %v579
    %823 = vmatpush1.bf16.msra.mxu0 %v578
    %824 = vmatprep.subr.bf16.mxu0 %v587
    %825 = vmatpush1.bf16.msra.mxu0 %v586
    %826 = vmatprep.subr.bf16.mxu0 %v595
    %827 = vmatpush1.bf16.msra.mxu0 %v594
    %828 = vmatprep.subr.bf16.mxu0 %v603
    %829 = vmatpush1.bf16.msra.mxu0 %v602
    %830 = vmatprep.subr.bf16.mxu0 %v611
    %831 = vmatpush1.bf16.msra.mxu0 %v610
    %832 = vmatprep.subr.bf16.mxu0 %v619
    %833 = vmatpush1.bf16.msra.mxu0 %v618
    %834 = vmatprep.subr.bf16.mxu0 %v627
    %835 = vmatpush1.bf16.msra.mxu0 %v626
    %836 = vmatprep.subr.bf16.mxu0 %v635
    %837 = vmatpush1.bf16.msra.mxu0 %v634
    %838 = vmatprep.subr.bf16.mxu0 %v643
    %839 = vmatpush1.bf16.msra.mxu0 %v642
    %840 = vmatprep.subr.bf16.mxu0 %v651
    %841 = vmatpush1.bf16.msra.mxu0 %v650
    %842 = vmatprep.subr.bf16.mxu0 %v659
    %843 = vmatpush1.bf16.msra.mxu0 %v658
    %844 = vmatprep.subr.bf16.mxu0 %v667
    %845 = vmatpush1.bf16.msra.mxu0 %v666
    %846 = vmatprep.subr.bf16.mxu0 %v675
    %847 = vmatpush1.bf16.msra.mxu0 %v674
    %848 = vmatprep.subr.bf16.mxu0 %v683
    %849 = vmatpush1.bf16.msra.mxu0 %v682
    %850 = vmatprep.mubr.bf16.mxu0 %v48
    %851 = vmatmul.mubr.bf16.gmra.mrb[0].mxu0 %v46
    %v852 = vpop.f32.mrb[0].mxu0
    %v853 = vadd.f32 0.0, %v852
    %v854 = vpop.f32.mrb[0].mxu0
    %v855 = vadd.f32 0.0, %v854
    %v856 = vpop.f32.mrb[0].mxu0
    %v857 = vadd.f32 0.0, %v856
    %v858 = vpop.f32.mrb[0].mxu0
    %v859 = vadd.f32 0.0, %v858
    %860 = vdwg.mxu0
    %861 = vmatprep.subr.bf16.mxu0 %v565
    %862 = vmatpush1.bf16.msra.mxu0 %v564
    %863 = vmatprep.subr.bf16.mxu0 %v573
    %864 = vmatpush1.bf16.msra.mxu0 %v572
    %865 = vmatprep.subr.bf16.mxu0 %v581
    %866 = vmatpush1.bf16.msra.mxu0 %v580
    %867 = vmatprep.subr.bf16.mxu0 %v589
    %868 = vmatpush1.bf16.msra.mxu0 %v588
    %869 = vmatprep.subr.bf16.mxu0 %v597
    %870 = vmatpush1.bf16.msra.mxu0 %v596
    %871 = vmatprep.subr.bf16.mxu0 %v605
    %872 = vmatpush1.bf16.msra.mxu0 %v604
    %873 = vmatprep.subr.bf16.mxu0 %v613
    %874 = vmatpush1.bf16.msra.mxu0 %v612
    %875 = vmatprep.subr.bf16.mxu0 %v621
    %876 = vmatpush1.bf16.msra.mxu0 %v620
    %877 = vmatprep.subr.bf16.mxu0 %v629
    %878 = vmatpush1.bf16.msra.mxu0 %v628
    %879 = vmatprep.subr.bf16.mxu0 %v637
    %880 = vmatpush1.bf16.msra.mxu0 %v636
    %881 = vmatprep.subr.bf16.mxu0 %v645
    %882 = vmatpush1.bf16.msra.mxu0 %v644
    %883 = vmatprep.subr.bf16.mxu0 %v653
    %884 = vmatpush1.bf16.msra.mxu0 %v652
    %885 = vmatprep.subr.bf16.mxu0 %v661
    %886 = vmatpush1.bf16.msra.mxu0 %v660
    %887 = vmatprep.subr.bf16.mxu0 %v669
    %888 = vmatpush1.bf16.msra.mxu0 %v668
    %889 = vmatprep.subr.bf16.mxu0 %v677
    %890 = vmatpush1.bf16.msra.mxu0 %v676
    %891 = vmatprep.subr.bf16.mxu0 %v685
    %892 = vmatpush1.bf16.msra.mxu0 %v684
    %893 = vmatprep.mubr.bf16.mxu0 %v48
    %894 = vmatmul.mubr.bf16.gmra.mrb[0].mxu0 %v46
    %v895 = vpop.f32.mrb[0].mxu0
    %v896 = vadd.f32 0.0, %v895
    %v897 = vpop.f32.mrb[0].mxu0
    %v898 = vadd.f32 0.0, %v897
    %v899 = vpop.f32.mrb[0].mxu0
    %v900 = vadd.f32 0.0, %v899
    %v901 = vpop.f32.mrb[0].mxu0
    %v902 = vadd.f32 0.0, %v901
    %903 = vdwg.mxu0
    %904 = vmatprep.subr.bf16.mxu0 %v567
    %905 = vmatpush1.bf16.msra.mxu0 %v566
    %906 = vmatprep.subr.bf16.mxu0 %v575
    %907 = vmatpush1.bf16.msra.mxu0 %v574
    %908 = vmatprep.subr.bf16.mxu0 %v583
    %909 = vmatpush1.bf16.msra.mxu0 %v582
    %910 = vmatprep.subr.bf16.mxu0 %v591
    %911 = vmatpush1.bf16.msra.mxu0 %v590
    %912 = vmatprep.subr.bf16.mxu0 %v599
    %913 = vmatpush1.bf16.msra.mxu0 %v598
    %914 = vmatprep.subr.bf16.mxu0 %v607
    %915 = vmatpush1.bf16.msra.mxu0 %v606
    %916 = vmatprep.subr.bf16.mxu0 %v615
    %917 = vmatpush1.bf16.msra.mxu0 %v614
    %918 = vmatprep.subr.bf16.mxu0 %v623
    %919 = vmatpush1.bf16.msra.mxu0 %v622
    %920 = vmatprep.subr.bf16.mxu0 %v631
    %921 = vmatpush1.bf16.msra.mxu0 %v630
    %922 = vmatprep.subr.bf16.mxu0 %v639
    %923 = vmatpush1.bf16.msra.mxu0 %v638
    %924 = vmatprep.subr.bf16.mxu0 %v647
    %925 = vmatpush1.bf16.msra.mxu0 %v646
    %926 = vmatprep.subr.bf16.mxu0 %v655
    %927 = vmatpush1.bf16.msra.mxu0 %v654
    %928 = vmatprep.subr.bf16.mxu0 %v663
    %929 = vmatpush1.bf16.msra.mxu0 %v662
    %930 = vmatprep.subr.bf16.mxu0 %v671
    %931 = vmatpush1.bf16.msra.mxu0 %v670
    %932 = vmatprep.subr.bf16.mxu0 %v679
    %933 = vmatpush1.bf16.msra.mxu0 %v678
    %934 = vmatprep.subr.bf16.mxu0 %v687
    %935 = vmatpush1.bf16.msra.mxu0 %v686
    %936 = vmatprep.mubr.bf16.mxu0 %v48
    %937 = vmatmul.mubr.bf16.gmra.mrb[0].mxu0 %v46
    %v938 = vpop.f32.mrb[0].mxu0
    %v939 = vadd.f32 0.0, %v938
    %v940 = vpop.f32.mrb[0].mxu0
    %v941 = vadd.f32 0.0, %v940
    %v942 = vpop.f32.mrb[0].mxu0
    %v943 = vadd.f32 0.0, %v942
    %v944 = vpop.f32.mrb[0].mxu0
    %v945 = vadd.f32 0.0, %v944
    %946 = vdwg.mxu0
    %947 = vmatprep.subr.bf16.mxu0 %v569
    %948 = vmatpush1.bf16.msra.mxu0 %v568
    %949 = vmatprep.subr.bf16.mxu0 %v577
    %950 = vmatpush1.bf16.msra.mxu0 %v576
    %951 = vmatprep.subr.bf16.mxu0 %v585
    %952 = vmatpush1.bf16.msra.mxu0 %v584
    %953 = vmatprep.subr.bf16.mxu0 %v593
    %954 = vmatpush1.bf16.msra.mxu0 %v592
    %955 = vmatprep.subr.bf16.mxu0 %v601
    %956 = vmatpush1.bf16.msra.mxu0 %v600
    %957 = vmatprep.subr.bf16.mxu0 %v609
    %958 = vmatpush1.bf16.msra.mxu0 %v608
    %959 = vmatprep.subr.bf16.mxu0 %v617
    %960 = vmatpush1.bf16.msra.mxu0 %v616
    %961 = vmatprep.subr.bf16.mxu0 %v625
    %962 = vmatpush1.bf16.msra.mxu0 %v624
    %963 = vmatprep.subr.bf16.mxu0 %v633
    %964 = vmatpush1.bf16.msra.mxu0 %v632
    %965 = vmatprep.subr.bf16.mxu0 %v641
    %966 = vmatpush1.bf16.msra.mxu0 %v640
    %967 = vmatprep.subr.bf16.mxu0 %v649
    %968 = vmatpush1.bf16.msra.mxu0 %v648
    %969 = vmatprep.subr.bf16.mxu0 %v657
    %970 = vmatpush1.bf16.msra.mxu0 %v656
    %971 = vmatprep.subr.bf16.mxu0 %v665
    %972 = vmatpush1.bf16.msra.mxu0 %v664
    %973 = vmatprep.subr.bf16.mxu0 %v673
    %974 = vmatpush1.bf16.msra.mxu0 %v672
    %975 = vmatprep.subr.bf16.mxu0 %v681
    %976 = vmatpush1.bf16.msra.mxu0 %v680
    %977 = vmatprep.subr.bf16.mxu0 %v689
    %978 = vmatpush1.bf16.msra.mxu0 %v688
    %979 = vmatprep.mubr.bf16.mxu0 %v48
    %980 = vmatmul.mubr.bf16.gmra.mrb[0].mxu0 %v46
    %v981 = vpop.f32.mrb[0].mxu0
    %v982 = vadd.f32 0.0, %v981
    %v983 = vpop.f32.mrb[0].mxu0
    %v984 = vadd.f32 0.0, %v983
    %v985 = vpop.f32.mrb[0].mxu0
    %v986 = vadd.f32 0.0, %v985
    %v987 = vpop.f32.mrb[0].mxu0
    %v988 = vadd.f32 0.0, %v987
    %989 = vdwg.mxu0
    %v990 = vmax.f32 %v853, %v896
    %v991 = vmax.f32 %v855, %v898
    %v992 = vmax.f32 %v857, %v900
    %v993 = vmax.f32 %v859, %v902
    %v994 = vmax.f32 %v939, %v982
    %v995 = vmax.f32 %v941, %v984
    %v996 = vmax.f32 %v943, %v986
    %v997 = vmax.f32 %v945, %v988
    %v998 = vmax.f32 %v990, %v994
    %v999 = vmax.f32 %v991, %v995
    %v1000 = vmax.f32 %v992, %v996
    %v1001 = vmax.f32 %v993, %v997
    %v1002 = vld [vmem:[%s2] sm:$0x3]
    %v1004 = vlaneseq
    %v1005 = vshrl.u32 %v1004, 7
    %v1006 = vsub.s32 0, %v1005
    %v1007 = vrot.slane %v1002, %v1006
    %v1008 = vlaneseq
    %v1009 = vshrl.u32 %v1008, 7
    %v1010 = vsub.s32 1, %v1009
    %v1011 = vrot.slane %v1002, %v1010
    %v1014 = vadd.f32 %v998, %v1007
    %v1015 = vadd.f32 %v999, %v1011
    %v1016 = vadd.f32 %v1000, %v1007
    %v1017 = vadd.f32 %v1001, %v1011
    %v1018 = vmax.f32 %v1014, 0.0
    %v1019 = vmax.f32 %v1015, 0.0
    %v1020 = vmax.f32 %v1016, 0.0
    %v1021 = vmax.f32 %v1017, 0.0
    %v1022 = vpack.c.bf16 %v1020, %v1018
    %v1023 = vpack.c.bf16 %v1021, %v1019
    %v1026 = vrot.slane %v1022, 1
    %v1027 = vrot.slane %v1023, 1
    %v1030 = vrot.slane %v1022, 2
    %v1031 = vrot.slane %v1023, 2
    %v1034 = vld [vmem:[%s3] sm:$0xff]
    %v1035 = vld [vmem:[%s3 + $0x8] sm:$0xff]
    %v1036 = vld [vmem:[%s3 + $0x10] sm:$0xff]
    %v1037 = vld [vmem:[%s3 + $0x18] sm:$0xff]
    %v1038 = vld [vmem:[%s3 + $0x20] sm:$0xff]
    %v1039 = vld [vmem:[%s3 + $0x28] sm:$0xff]
    %v1040 = vld [vmem:[%s3 + $0x30] sm:$0xff]
    %v1041 = vld [vmem:[%s3 + $0x38] sm:$0xff]
    %v1042 = vld [vmem:[%s3 + $0x40] sm:$0xff]
    %v1043 = vld [vmem:[%s3 + $0x48] sm:$0xff]
    %v1044 = vld [vmem:[%s3 + $0x50] sm:$0xff]
    %v1045 = vld [vmem:[%s3 + $0x58] sm:$0xff]
    %v1046 = vld [vmem:[%s3 + $0x60] sm:$0xff]
    %v1047 = vld [vmem:[%s3 + $0x68] sm:$0xff]
    %v1048 = vld [vmem:[%s3 + $0x70] sm:$0xff]
    %v1049 = vld [vmem:[%s3 + $0x78] sm:$0xff]
    %v1050 = vld [vmem:[%s3 + $0x80] sm:$0xff]
    %v1051 = vld [vmem:[%s3 + $0x88] sm:$0xff]
    %v1052 = vld [vmem:[%s3 + $0x90] sm:$0xff]
    %v1053 = vld [vmem:[%s3 + $0x98] sm:$0xff]
    %v1054 = vld [vmem:[%s3 + $0xa0] sm:$0xff]
    %v1055 = vld [vmem:[%s3 + $0xa8] sm:$0xff]
    %v1056 = vld [vmem:[%s3 + $0xb0] sm:$0xff]
    %v1057 = vld [vmem:[%s3 + $0xb8] sm:$0xff]
    %v1058 = vld [vmem:[%s3 + $0xc0] sm:$0xff]
    %v1059 = vld [vmem:[%s3 + $0xc8] sm:$0xff]
    %v1060 = vld [vmem:[%s3 + $0xd0] sm:$0xff]
    %v1061 = vld [vmem:[%s3 + $0xd8] sm:$0xff]
    %v1062 = vld [vmem:[%s3 + $0xe0] sm:$0xff]
    %v1063 = vld [vmem:[%s3 + $0xe8] sm:$0xff]
    %v1064 = vld [vmem:[%s3 + $0xf0] sm:$0xff]
    %v1065 = vld [vmem:[%s3 + $0xf8] sm:$0xff]
    %v1066 = vld [vmem:[%s3 + $0x100] sm:$0xff]
    %v1067 = vld [vmem:[%s3 + $0x108] sm:$0xff]
    %v1068 = vld [vmem:[%s3 + $0x110] sm:$0xff]
    %v1069 = vld [vmem:[%s3 + $0x118] sm:$0xff]
    %v1070 = vld [vmem:[%s3 + $0x120] sm:$0xff]
    %v1071 = vld [vmem:[%s3 + $0x128] sm:$0xff]
    %v1072 = vld [vmem:[%s3 + $0x130] sm:$0xff]
    %v1073 = vld [vmem:[%s3 + $0x138] sm:$0xff]
    %v1074 = vld [vmem:[%s3 + $0x140] sm:$0xff]
    %v1075 = vld [vmem:[%s3 + $0x148] sm:$0xff]
    %v1076 = vld [vmem:[%s3 + $0x150] sm:$0xff]
    %v1077 = vld [vmem:[%s3 + $0x158] sm:$0xff]
    %v1078 = vld [vmem:[%s3 + $0x160] sm:$0xff]
    %v1079 = vld [vmem:[%s3 + $0x168] sm:$0xff]
    %v1080 = vld [vmem:[%s3 + $0x170] sm:$0xff]
    %v1081 = vld [vmem:[%s3 + $0x178] sm:$0xff]
    %v1082 = vld [vmem:[%s3 + $0x180] sm:$0xff]
    %v1083 = vld [vmem:[%s3 + $0x188] sm:$0xff]
    %v1084 = vld [vmem:[%s3 + $0x190] sm:$0xff]
    %v1085 = vld [vmem:[%s3 + $0x198] sm:$0xff]
    %v1086 = vld [vmem:[%s3 + $0x1a0] sm:$0xff]
    %v1087 = vld [vmem:[%s3 + $0x1a8] sm:$0xff]
    %v1088 = vld [vmem:[%s3 + $0x1b0] sm:$0xff]
    %v1089 = vld [vmem:[%s3 + $0x1b8] sm:$0xff]
    %v1090 = vld [vmem:[%s3 + $0x1c0] sm:$0xff]
    %v1091 = vld [vmem:[%s3 + $0x1c8] sm:$0xff]
    %v1092 = vld [vmem:[%s3 + $0x1d0] sm:$0xff]
    %v1093 = vld [vmem:[%s3 + $0x1d8] sm:$0xff]
    %v1094 = vld [vmem:[%s3 + $0x1e0] sm:$0xff]
    %v1095 = vld [vmem:[%s3 + $0x1e8] sm:$0xff]
    %v1096 = vld [vmem:[%s3 + $0x1f0] sm:$0xff]
    %v1097 = vld [vmem:[%s3 + $0x1f8] sm:$0xff]
    %v1098 = vld [vmem:[%s3 + $0x200] sm:$0xff]
    %v1099 = vld [vmem:[%s3 + $0x208] sm:$0xff]
    %v1100 = vld [vmem:[%s3 + $0x210] sm:$0xff]
    %v1101 = vld [vmem:[%s3 + $0x218] sm:$0xff]
    %v1102 = vld [vmem:[%s3 + $0x220] sm:$0xff]
    %v1103 = vld [vmem:[%s3 + $0x228] sm:$0xff]
    %v1104 = vld [vmem:[%s3 + $0x230] sm:$0xff]
    %v1105 = vld [vmem:[%s3 + $0x238] sm:$0xff]
    %v1106 = vld [vmem:[%s3 + $0x240] sm:$0xff]
    %v1107 = vld [vmem:[%s3 + $0x248] sm:$0xff]
    %v1108 = vld [vmem:[%s3 + $0x250] sm:$0xff]
    %v1109 = vld [vmem:[%s3 + $0x258] sm:$0xff]
    %v1110 = vld [vmem:[%s3 + $0x260] sm:$0xff]
    %v1111 = vld [vmem:[%s3 + $0x268] sm:$0xff]
    %v1112 = vld [vmem:[%s3 + $0x270] sm:$0xff]
    %v1113 = vld [vmem:[%s3 + $0x278] sm:$0xff]
    %v1114 = vld [vmem:[%s3 + $0x280] sm:$0xff]
    %v1115 = vld [vmem:[%s3 + $0x288] sm:$0xff]
    %v1116 = vld [vmem:[%s3 + $0x290] sm:$0xff]
    %v1117 = vld [vmem:[%s3 + $0x298] sm:$0xff]
    %v1118 = vld [vmem:[%s3 + $0x2a0] sm:$0xff]
    %v1119 = vld [vmem:[%s3 + $0x2a8] sm:$0xff]
    %v1120 = vld [vmem:[%s3 + $0x2b0] sm:$0xff]
    %v1121 = vld [vmem:[%s3 + $0x2b8] sm:$0xff]
    %v1122 = vld [vmem:[%s3 + $0x2c0] sm:$0xff]
    %v1123 = vld [vmem:[%s3 + $0x2c8] sm:$0xff]
    %v1124 = vld [vmem:[%s3 + $0x2d0] sm:$0xff]
    %v1125 = vld [vmem:[%s3 + $0x2d8] sm:$0xff]
    %v1126 = vld [vmem:[%s3 + $0x2e0] sm:$0xff]
    %v1127 = vld [vmem:[%s3 + $0x2e8] sm:$0xff]
    %v1128 = vld [vmem:[%s3 + $0x2f0] sm:$0xff]
    %v1129 = vld [vmem:[%s3 + $0x2f8] sm:$0xff]
    %v1130 = vld [vmem:[%s3 + $0x300] sm:$0xff]
    %v1131 = vld [vmem:[%s3 + $0x308] sm:$0xff]
    %v1132 = vld [vmem:[%s3 + $0x310] sm:$0xff]
    %v1133 = vld [vmem:[%s3 + $0x318] sm:$0xff]
    %v1134 = vld [vmem:[%s3 + $0x320] sm:$0xff]
    %v1135 = vld [vmem:[%s3 + $0x328] sm:$0xff]
    %v1136 = vld [vmem:[%s3 + $0x330] sm:$0xff]
    %v1137 = vld [vmem:[%s3 + $0x338] sm:$0xff]
    %v1138 = vld [vmem:[%s3 + $0x340] sm:$0xff]
    %v1139 = vld [vmem:[%s3 + $0x348] sm:$0xff]
    %v1140 = vld [vmem:[%s3 + $0x350] sm:$0xff]
    %v1141 = vld [vmem:[%s3 + $0x358] sm:$0xff]
    %v1142 = vld [vmem:[%s3 + $0x360] sm:$0xff]
    %v1143 = vld [vmem:[%s3 + $0x368] sm:$0xff]
    %v1144 = vld [vmem:[%s3 + $0x370] sm:$0xff]
    %v1145 = vld [vmem:[%s3 + $0x378] sm:$0xff]
    %v1146 = vld [vmem:[%s3 + $0x380] sm:$0xff]
    %v1147 = vld [vmem:[%s3 + $0x388] sm:$0xff]
    %v1148 = vld [vmem:[%s3 + $0x390] sm:$0xff]
    %v1149 = vld [vmem:[%s3 + $0x398] sm:$0xff]
    %v1150 = vld [vmem:[%s3 + $0x3a0] sm:$0xff]
    %v1151 = vld [vmem:[%s3 + $0x3a8] sm:$0xff]
    %v1152 = vld [vmem:[%s3 + $0x3b0] sm:$0xff]
    %v1153 = vld [vmem:[%s3 + $0x3b8] sm:$0xff]
    %v1154 = vld [vmem:[%s3 + $0x3c0] sm:$0xff]
    %v1155 = vld [vmem:[%s3 + $0x3c8] sm:$0xff]
    %v1156 = vld [vmem:[%s3 + $0x3d0] sm:$0xff]
    %v1157 = vld [vmem:[%s3 + $0x3d8] sm:$0xff]
    %v1158 = vld [vmem:[%s3 + $0x3e0] sm:$0xff]
    %v1159 = vld [vmem:[%s3 + $0x3e8] sm:$0xff]
    %v1160 = vld [vmem:[%s3 + $0x3f0] sm:$0xff]
    %v1161 = vld [vmem:[%s3 + $0x3f8] sm:$0xff]
    %v1162 = vld [vmem:[%s3 + $0x400] sm:$0xff]
    %v1163 = vld [vmem:[%s3 + $0x408] sm:$0xff]
    %v1164 = vld [vmem:[%s3 + $0x410] sm:$0xff]
    %v1165 = vld [vmem:[%s3 + $0x418] sm:$0xff]
    %v1166 = vld [vmem:[%s3 + $0x420] sm:$0xff]
    %v1167 = vld [vmem:[%s3 + $0x428] sm:$0xff]
    %v1168 = vld [vmem:[%s3 + $0x430] sm:$0xff]
    %v1169 = vld [vmem:[%s3 + $0x438] sm:$0xff]
    %v1170 = vld [vmem:[%s3 + $0x440] sm:$0xff]
    %v1171 = vld [vmem:[%s3 + $0x448] sm:$0xff]
    %v1172 = vld [vmem:[%s3 + $0x450] sm:$0xff]
    %v1173 = vld [vmem:[%s3 + $0x458] sm:$0xff]
    %v1174 = vld [vmem:[%s3 + $0x460] sm:$0xff]
    %v1175 = vld [vmem:[%s3 + $0x468] sm:$0xff]
    %v1176 = vld [vmem:[%s3 + $0x470] sm:$0xff]
    %v1177 = vld [vmem:[%s3 + $0x478] sm:$0xff]
    %v1178 = vld [vmem:[%s3 + $0x480] sm:$0xff]
    %v1179 = vld [vmem:[%s3 + $0x488] sm:$0xff]
    %v1180 = vld [vmem:[%s3 + $0x490] sm:$0xff]
    %v1181 = vld [vmem:[%s3 + $0x498] sm:$0xff]
    %v1182 = vld [vmem:[%s3 + $0x4a0] sm:$0xff]
    %v1183 = vld [vmem:[%s3 + $0x4a8] sm:$0xff]
    %v1184 = vld [vmem:[%s3 + $0x4b0] sm:$0xff]
    %v1185 = vld [vmem:[%s3 + $0x4b8] sm:$0xff]
    %v1186 = vld [vmem:[%s3 + $0x4c0] sm:$0xff]
    %v1187 = vld [vmem:[%s3 + $0x4c8] sm:$0xff]
    %v1188 = vld [vmem:[%s3 + $0x4d0] sm:$0xff]
    %v1189 = vld [vmem:[%s3 + $0x4d8] sm:$0xff]
    %v1190 = vld [vmem:[%s3 + $0x4e0] sm:$0xff]
    %v1191 = vld [vmem:[%s3 + $0x4e8] sm:$0xff]
    %v1192 = vld [vmem:[%s3 + $0x4f0] sm:$0xff]
    %v1193 = vld [vmem:[%s3 + $0x4f8] sm:$0xff]
    %v1194 = vld [vmem:[%s3 + $0x500] sm:$0xff]
    %v1195 = vld [vmem:[%s3 + $0x508] sm:$0xff]
    %v1196 = vld [vmem:[%s3 + $0x510] sm:$0xff]
    %v1197 = vld [vmem:[%s3 + $0x518] sm:$0xff]
    %v1198 = vld [vmem:[%s3 + $0x520] sm:$0xff]
    %v1199 = vld [vmem:[%s3 + $0x528] sm:$0xff]
    %v1200 = vld [vmem:[%s3 + $0x530] sm:$0xff]
    %v1201 = vld [vmem:[%s3 + $0x538] sm:$0xff]
    %v1202 = vld [vmem:[%s3 + $0x540] sm:$0xff]
    %v1203 = vld [vmem:[%s3 + $0x548] sm:$0xff]
    %v1204 = vld [vmem:[%s3 + $0x550] sm:$0xff]
    %v1205 = vld [vmem:[%s3 + $0x558] sm:$0xff]
    %v1206 = vld [vmem:[%s3 + $0x560] sm:$0xff]
    %v1207 = vld [vmem:[%s3 + $0x568] sm:$0xff]
    %v1208 = vld [vmem:[%s3 + $0x570] sm:$0xff]
    %v1209 = vld [vmem:[%s3 + $0x578] sm:$0xff]
    %v1210 = vld [vmem:[%s3 + $0x580] sm:$0xff]
    %v1211 = vld [vmem:[%s3 + $0x588] sm:$0xff]
    %v1212 = vld [vmem:[%s3 + $0x590] sm:$0xff]
    %v1213 = vld [vmem:[%s3 + $0x598] sm:$0xff]
    %v1214 = vld [vmem:[%s3 + $0x5a0] sm:$0xff]
    %v1215 = vld [vmem:[%s3 + $0x5a8] sm:$0xff]
    %v1216 = vld [vmem:[%s3 + $0x5b0] sm:$0xff]
    %v1217 = vld [vmem:[%s3 + $0x5b8] sm:$0xff]
    %v1218 = vld [vmem:[%s3 + $0x5c0] sm:$0xff]
    %v1219 = vld [vmem:[%s3 + $0x5c8] sm:$0xff]
    %v1220 = vld [vmem:[%s3 + $0x5d0] sm:$0xff]
    %v1221 = vld [vmem:[%s3 + $0x5d8] sm:$0xff]
    %v1222 = vld [vmem:[%s3 + $0x5e0] sm:$0xff]
    %v1223 = vld [vmem:[%s3 + $0x5e8] sm:$0xff]
    %v1224 = vld [vmem:[%s3 + $0x5f0] sm:$0xff]
    %v1225 = vld [vmem:[%s3 + $0x5f8] sm:$0xff]
    %v1418 = vunpack.c.l.b16 %v1034
    %v1419 = vunpack.c.h.b16 %v1034
    %v1420 = vunpack.c.l.b16 %v1035
    %v1421 = vunpack.c.h.b16 %v1035
    %v1422 = vunpack.c.l.b16 %v1036
    %v1423 = vunpack.c.h.b16 %v1036
    %v1424 = vunpack.c.l.b16 %v1037
    %v1425 = vunpack.c.h.b16 %v1037
    %v1426 = vunpack.c.l.b16 %v1038
    %v1427 = vunpack.c.h.b16 %v1038
    %v1428 = vunpack.c.l.b16 %v1039
    %v1429 = vunpack.c.h.b16 %v1039
    %v1430 = vunpack.c.l.b16 %v1040
    %v1431 = vunpack.c.h.b16 %v1040
    %v1432 = vunpack.c.l.b16 %v1041
    %v1433 = vunpack.c.h.b16 %v1041
    %v1434 = vunpack.c.l.b16 %v1042
    %v1435 = vunpack.c.h.b16 %v1042
    %v1436 = vunpack.c.l.b16 %v1043
    %v1437 = vunpack.c.h.b16 %v1043
    %v1438 = vunpack.c.l.b16 %v1044
    %v1439 = vunpack.c.h.b16 %v1044
    %v1440 = vunpack.c.l.b16 %v1045
    %v1441 = vunpack.c.h.b16 %v1045
    %v1442 = vunpack.c.l.b16 %v1046
    %v1443 = vunpack.c.h.b16 %v1046
    %v1444 = vunpack.c.l.b16 %v1047
    %v1445 = vunpack.c.h.b16 %v1047
    %v1446 = vunpack.c.l.b16 %v1048
    %v1447 = vunpack.c.h.b16 %v1048
    %v1448 = vunpack.c.l.b16 %v1049
    %v1449 = vunpack.c.h.b16 %v1049
    %v1450 = vunpack.c.l.b16 %v1050
    %v1451 = vunpack.c.h.b16 %v1050
    %v1452 = vunpack.c.l.b16 %v1051
    %v1453 = vunpack.c.h.b16 %v1051
    %v1454 = vunpack.c.l.b16 %v1052
    %v1455 = vunpack.c.h.b16 %v1052
    %v1456 = vunpack.c.l.b16 %v1053
    %v1457 = vunpack.c.h.b16 %v1053
    %v1458 = vunpack.c.l.b16 %v1054
    %v1459 = vunpack.c.h.b16 %v1054
    %v1460 = vunpack.c.l.b16 %v1055
    %v1461 = vunpack.c.h.b16 %v1055
    %v1462 = vunpack.c.l.b16 %v1056
    %v1463 = vunpack.c.h.b16 %v1056
    %v1464 = vunpack.c.l.b16 %v1057
    %v1465 = vunpack.c.h.b16 %v1057
    %v1466 = vunpack.c.l.b16 %v1058
    %v1467 = vunpack.c.h.b16 %v1058
    %v1468 = vunpack.c.l.b16 %v1059
    %v1469 = vunpack.c.h.b16 %v1059
    %v1470 = vunpack.c.l.b16 %v1060
    %v1471 = vunpack.c.h.b16 %v1060
    %v1472 = vunpack.c.l.b16 %v1061
    %v1473 = vunpack.c.h.b16 %v1061
    %v1474 = vunpack.c.l.b16 %v1062
    %v1475 = vunpack.c.h.b16 %v1062
    %v1476 = vunpack.c.l.b16 %v1063
    %v1477 = vunpack.c.h.b16 %v1063
    %v1478 = vunpack.c.l.b16 %v1064
    %v1479 = vunpack.c.h.b16 %v1064
    %v1480 = vunpack.c.l.b16 %v1065
    %v1481 = vunpack.c.h.b16 %v1065
    %v1482 = vunpack.c.l.b16 %v1066
    %v1483 = vunpack.c.h.b16 %v1066
    %v1484 = vunpack.c.l.b16 %v1067
    %v1485 = vunpack.c.h.b16 %v1067
    %v1486 = vunpack.c.l.b16 %v1068
    %v1487 = vunpack.c.h.b16 %v1068
    %v1488 = vunpack.c.l.b16 %v1069
    %v1489 = vunpack.c.h.b16 %v1069
    %v1490 = vunpack.c.l.b16 %v1070
    %v1491 = vunpack.c.h.b16 %v1070
    %v1492 = vunpack.c.l.b16 %v1071
    %v1493 = vunpack.c.h.b16 %v1071
    %v1494 = vunpack.c.l.b16 %v1072
    %v1495 = vunpack.c.h.b16 %v1072
    %v1496 = vunpack.c.l.b16 %v1073
    %v1497 = vunpack.c.h.b16 %v1073
    %v1498 = vunpack.c.l.b16 %v1074
    %v1499 = vunpack.c.h.b16 %v1074
    %v1500 = vunpack.c.l.b16 %v1075
    %v1501 = vunpack.c.h.b16 %v1075
    %v1502 = vunpack.c.l.b16 %v1076
    %v1503 = vunpack.c.h.b16 %v1076
    %v1504 = vunpack.c.l.b16 %v1077
    %v1505 = vunpack.c.h.b16 %v1077
    %v1506 = vunpack.c.l.b16 %v1078
    %v1507 = vunpack.c.h.b16 %v1078
    %v1508 = vunpack.c.l.b16 %v1079
    %v1509 = vunpack.c.h.b16 %v1079
    %v1510 = vunpack.c.l.b16 %v1080
    %v1511 = vunpack.c.h.b16 %v1080
    %v1512 = vunpack.c.l.b16 %v1081
    %v1513 = vunpack.c.h.b16 %v1081
    %v1514 = vunpack.c.l.b16 %v1082
    %v1515 = vunpack.c.h.b16 %v1082
    %v1516 = vunpack.c.l.b16 %v1083
    %v1517 = vunpack.c.h.b16 %v1083
    %v1518 = vunpack.c.l.b16 %v1084
    %v1519 = vunpack.c.h.b16 %v1084
    %v1520 = vunpack.c.l.b16 %v1085
    %v1521 = vunpack.c.h.b16 %v1085
    %v1522 = vunpack.c.l.b16 %v1086
    %v1523 = vunpack.c.h.b16 %v1086
    %v1524 = vunpack.c.l.b16 %v1087
    %v1525 = vunpack.c.h.b16 %v1087
    %v1526 = vunpack.c.l.b16 %v1088
    %v1527 = vunpack.c.h.b16 %v1088
    %v1528 = vunpack.c.l.b16 %v1089
    %v1529 = vunpack.c.h.b16 %v1089
    %v1530 = vunpack.c.l.b16 %v1090
    %v1531 = vunpack.c.h.b16 %v1090
    %v1532 = vunpack.c.l.b16 %v1091
    %v1533 = vunpack.c.h.b16 %v1091
    %v1534 = vunpack.c.l.b16 %v1092
    %v1535 = vunpack.c.h.b16 %v1092
    %v1536 = vunpack.c.l.b16 %v1093
    %v1537 = vunpack.c.h.b16 %v1093
    %v1538 = vunpack.c.l.b16 %v1094
    %v1539 = vunpack.c.h.b16 %v1094
    %v1540 = vunpack.c.l.b16 %v1095
    %v1541 = vunpack.c.h.b16 %v1095
    %v1542 = vunpack.c.l.b16 %v1096
    %v1543 = vunpack.c.h.b16 %v1096
    %v1544 = vunpack.c.l.b16 %v1097
    %v1545 = vunpack.c.h.b16 %v1097
    %v1546 = vunpack.c.l.b16 %v1098
    %v1547 = vunpack.c.h.b16 %v1098
    %v1548 = vunpack.c.l.b16 %v1099
    %v1549 = vunpack.c.h.b16 %v1099
    %v1550 = vunpack.c.l.b16 %v1100
    %v1551 = vunpack.c.h.b16 %v1100
    %v1552 = vunpack.c.l.b16 %v1101
    %v1553 = vunpack.c.h.b16 %v1101
    %v1554 = vunpack.c.l.b16 %v1102
    %v1555 = vunpack.c.h.b16 %v1102
    %v1556 = vunpack.c.l.b16 %v1103
    %v1557 = vunpack.c.h.b16 %v1103
    %v1558 = vunpack.c.l.b16 %v1104
    %v1559 = vunpack.c.h.b16 %v1104
    %v1560 = vunpack.c.l.b16 %v1105
    %v1561 = vunpack.c.h.b16 %v1105
    %v1562 = vunpack.c.l.b16 %v1106
    %v1563 = vunpack.c.h.b16 %v1106
    %v1564 = vunpack.c.l.b16 %v1107
    %v1565 = vunpack.c.h.b16 %v1107
    %v1566 = vunpack.c.l.b16 %v1108
    %v1567 = vunpack.c.h.b16 %v1108
    %v1568 = vunpack.c.l.b16 %v1109
    %v1569 = vunpack.c.h.b16 %v1109
    %v1570 = vunpack.c.l.b16 %v1110
    %v1571 = vunpack.c.h.b16 %v1110
    %v1572 = vunpack.c.l.b16 %v1111
    %v1573 = vunpack.c.h.b16 %v1111
    %v1574 = vunpack.c.l.b16 %v1112
    %v1575 = vunpack.c.h.b16 %v1112
    %v1576 = vunpack.c.l.b16 %v1113
    %v1577 = vunpack.c.h.b16 %v1113
    %v1578 = vunpack.c.l.b16 %v1114
    %v1579 = vunpack.c.h.b16 %v1114
    %v1580 = vunpack.c.l.b16 %v1115
    %v1581 = vunpack.c.h.b16 %v1115
    %v1582 = vunpack.c.l.b16 %v1116
    %v1583 = vunpack.c.h.b16 %v1116
    %v1584 = vunpack.c.l.b16 %v1117
    %v1585 = vunpack.c.h.b16 %v1117
    %v1586 = vunpack.c.l.b16 %v1118
    %v1587 = vunpack.c.h.b16 %v1118
    %v1588 = vunpack.c.l.b16 %v1119
    %v1589 = vunpack.c.h.b16 %v1119
    %v1590 = vunpack.c.l.b16 %v1120
    %v1591 = vunpack.c.h.b16 %v1120
    %v1592 = vunpack.c.l.b16 %v1121
    %v1593 = vunpack.c.h.b16 %v1121
    %v1594 = vunpack.c.l.b16 %v1122
    %v1595 = vunpack.c.h.b16 %v1122
    %v1596 = vunpack.c.l.b16 %v1123
    %v1597 = vunpack.c.h.b16 %v1123
    %v1598 = vunpack.c.l.b16 %v1124
    %v1599 = vunpack.c.h.b16 %v1124
    %v1600 = vunpack.c.l.b16 %v1125
    %v1601 = vunpack.c.h.b16 %v1125
    %v1602 = vunpack.c.l.b16 %v1126
    %v1603 = vunpack.c.h.b16 %v1126
    %v1604 = vunpack.c.l.b16 %v1127
    %v1605 = vunpack.c.h.b16 %v1127
    %v1606 = vunpack.c.l.b16 %v1128
    %v1607 = vunpack.c.h.b16 %v1128
    %v1608 = vunpack.c.l.b16 %v1129
    %v1609 = vunpack.c.h.b16 %v1129
    %v1610 = vunpack.c.l.b16 %v1130
    %v1611 = vunpack.c.h.b16 %v1130
    %v1612 = vunpack.c.l.b16 %v1131
    %v1613 = vunpack.c.h.b16 %v1131
    %v1614 = vunpack.c.l.b16 %v1132
    %v1615 = vunpack.c.h.b16 %v1132
    %v1616 = vunpack.c.l.b16 %v1133
    %v1617 = vunpack.c.h.b16 %v1133
    %v1618 = vunpack.c.l.b16 %v1134
    %v1619 = vunpack.c.h.b16 %v1134
    %v1620 = vunpack.c.l.b16 %v1135
    %v1621 = vunpack.c.h.b16 %v1135
    %v1622 = vunpack.c.l.b16 %v1136
    %v1623 = vunpack.c.h.b16 %v1136
    %v1624 = vunpack.c.l.b16 %v1137
    %v1625 = vunpack.c.h.b16 %v1137
    %v1626 = vunpack.c.l.b16 %v1138
    %v1627 = vunpack.c.h.b16 %v1138
    %v1628 = vunpack.c.l.b16 %v1139
    %v1629 = vunpack.c.h.b16 %v1139
    %v1630 = vunpack.c.l.b16 %v1140
    %v1631 = vunpack.c.h.b16 %v1140
    %v1632 = vunpack.c.l.b16 %v1141
    %v1633 = vunpack.c.h.b16 %v1141
    %v1634 = vunpack.c.l.b16 %v1142
    %v1635 = vunpack.c.h.b16 %v1142
    %v1636 = vunpack.c.l.b16 %v1143
    %v1637 = vunpack.c.h.b16 %v1143
    %v1638 = vunpack.c.l.b16 %v1144
    %v1639 = vunpack.c.h.b16 %v1144
    %v1640 = vunpack.c.l.b16 %v1145
    %v1641 = vunpack.c.h.b16 %v1145
    %v1642 = vunpack.c.l.b16 %v1146
    %v1643 = vunpack.c.h.b16 %v1146
    %v1644 = vunpack.c.l.b16 %v1147
    %v1645 = vunpack.c.h.b16 %v1147
    %v1646 = vunpack.c.l.b16 %v1148
    %v1647 = vunpack.c.h.b16 %v1148
    %v1648 = vunpack.c.l.b16 %v1149
    %v1649 = vunpack.c.h.b16 %v1149
    %v1650 = vunpack.c.l.b16 %v1150
    %v1651 = vunpack.c.h.b16 %v1150
    %v1652 = vunpack.c.l.b16 %v1151
    %v1653 = vunpack.c.h.b16 %v1151
    %v1654 = vunpack.c.l.b16 %v1152
    %v1655 = vunpack.c.h.b16 %v1152
    %v1656 = vunpack.c.l.b16 %v1153
    %v1657 = vunpack.c.h.b16 %v1153
    %v1658 = vunpack.c.l.b16 %v1154
    %v1659 = vunpack.c.h.b16 %v1154
    %v1660 = vunpack.c.l.b16 %v1155
    %v1661 = vunpack.c.h.b16 %v1155
    %v1662 = vunpack.c.l.b16 %v1156
    %v1663 = vunpack.c.h.b16 %v1156
    %v1664 = vunpack.c.l.b16 %v1157
    %v1665 = vunpack.c.h.b16 %v1157
    %v1666 = vunpack.c.l.b16 %v1158
    %v1667 = vunpack.c.h.b16 %v1158
    %v1668 = vunpack.c.l.b16 %v1159
    %v1669 = vunpack.c.h.b16 %v1159
    %v1670 = vunpack.c.l.b16 %v1160
    %v1671 = vunpack.c.h.b16 %v1160
    %v1672 = vunpack.c.l.b16 %v1161
    %v1673 = vunpack.c.h.b16 %v1161
    %v1674 = vunpack.c.l.b16 %v1162
    %v1675 = vunpack.c.h.b16 %v1162
    %v1676 = vunpack.c.l.b16 %v1163
    %v1677 = vunpack.c.h.b16 %v1163
    %v1678 = vunpack.c.l.b16 %v1164
    %v1679 = vunpack.c.h.b16 %v1164
    %v1680 = vunpack.c.l.b16 %v1165
    %v1681 = vunpack.c.h.b16 %v1165
    %v1682 = vunpack.c.l.b16 %v1166
    %v1683 = vunpack.c.h.b16 %v1166
    %v1684 = vunpack.c.l.b16 %v1167
    %v1685 = vunpack.c.h.b16 %v1167
    %v1686 = vunpack.c.l.b16 %v1168
    %v1687 = vunpack.c.h.b16 %v1168
    %v1688 = vunpack.c.l.b16 %v1169
    %v1689 = vunpack.c.h.b16 %v1169
    %v1690 = vunpack.c.l.b16 %v1170
    %v1691 = vunpack.c.h.b16 %v1170
    %v1692 = vunpack.c.l.b16 %v1171
    %v1693 = vunpack.c.h.b16 %v1171
    %v1694 = vunpack.c.l.b16 %v1172
    %v1695 = vunpack.c.h.b16 %v1172
    %v1696 = vunpack.c.l.b16 %v1173
    %v1697 = vunpack.c.h.b16 %v1173
    %v1698 = vunpack.c.l.b16 %v1174
    %v1699 = vunpack.c.h.b16 %v1174
    %v1700 = vunpack.c.l.b16 %v1175
    %v1701 = vunpack.c.h.b16 %v1175
    %v1702 = vunpack.c.l.b16 %v1176
    %v1703 = vunpack.c.h.b16 %v1176
    %v1704 = vunpack.c.l.b16 %v1177
    %v1705 = vunpack.c.h.b16 %v1177
    %v1706 = vunpack.c.l.b16 %v1178
    %v1707 = vunpack.c.h.b16 %v1178
    %v1708 = vunpack.c.l.b16 %v1179
    %v1709 = vunpack.c.h.b16 %v1179
    %v1710 = vunpack.c.l.b16 %v1180
    %v1711 = vunpack.c.h.b16 %v1180
    %v1712 = vunpack.c.l.b16 %v1181
    %v1713 = vunpack.c.h.b16 %v1181
    %v1714 = vunpack.c.l.b16 %v1182
    %v1715 = vunpack.c.h.b16 %v1182
    %v1716 = vunpack.c.l.b16 %v1183
    %v1717 = vunpack.c.h.b16 %v1183
    %v1718 = vunpack.c.l.b16 %v1184
    %v1719 = vunpack.c.h.b16 %v1184
    %v1720 = vunpack.c.l.b16 %v1185
    %v1721 = vunpack.c.h.b16 %v1185
    %v1722 = vunpack.c.l.b16 %v1186
    %v1723 = vunpack.c.h.b16 %v1186
    %v1724 = vunpack.c.l.b16 %v1187
    %v1725 = vunpack.c.h.b16 %v1187
    %v1726 = vunpack.c.l.b16 %v1188
    %v1727 = vunpack.c.h.b16 %v1188
    %v1728 = vunpack.c.l.b16 %v1189
    %v1729 = vunpack.c.h.b16 %v1189
    %v1730 = vunpack.c.l.b16 %v1190
    %v1731 = vunpack.c.h.b16 %v1190
    %v1732 = vunpack.c.l.b16 %v1191
    %v1733 = vunpack.c.h.b16 %v1191
    %v1734 = vunpack.c.l.b16 %v1192
    %v1735 = vunpack.c.h.b16 %v1192
    %v1736 = vunpack.c.l.b16 %v1193
    %v1737 = vunpack.c.h.b16 %v1193
    %v1738 = vunpack.c.l.b16 %v1194
    %v1739 = vunpack.c.h.b16 %v1194
    %v1740 = vunpack.c.l.b16 %v1195
    %v1741 = vunpack.c.h.b16 %v1195
    %v1742 = vunpack.c.l.b16 %v1196
    %v1743 = vunpack.c.h.b16 %v1196
    %v1744 = vunpack.c.l.b16 %v1197
    %v1745 = vunpack.c.h.b16 %v1197
    %v1746 = vunpack.c.l.b16 %v1198
    %v1747 = vunpack.c.h.b16 %v1198
    %v1748 = vunpack.c.l.b16 %v1199
    %v1749 = vunpack.c.h.b16 %v1199
    %v1750 = vunpack.c.l.b16 %v1200
    %v1751 = vunpack.c.h.b16 %v1200
    %v1752 = vunpack.c.l.b16 %v1201
    %v1753 = vunpack.c.h.b16 %v1201
    %v1754 = vunpack.c.l.b16 %v1202
    %v1755 = vunpack.c.h.b16 %v1202
    %v1756 = vunpack.c.l.b16 %v1203
    %v1757 = vunpack.c.h.b16 %v1203
    %v1758 = vunpack.c.l.b16 %v1204
    %v1759 = vunpack.c.h.b16 %v1204
    %v1760 = vunpack.c.l.b16 %v1205
    %v1761 = vunpack.c.h.b16 %v1205
    %v1762 = vunpack.c.l.b16 %v1206
    %v1763 = vunpack.c.h.b16 %v1206
    %v1764 = vunpack.c.l.b16 %v1207
    %v1765 = vunpack.c.h.b16 %v1207
    %v1766 = vunpack.c.l.b16 %v1208
    %v1767 = vunpack.c.h.b16 %v1208
    %v1768 = vunpack.c.l.b16 %v1209
    %v1769 = vunpack.c.h.b16 %v1209
    %v1770 = vunpack.c.l.b16 %v1210
    %v1771 = vunpack.c.h.b16 %v1210
    %v1772 = vunpack.c.l.b16 %v1211
    %v1773 = vunpack.c.h.b16 %v1211
    %v1774 = vunpack.c.l.b16 %v1212
    %v1775 = vunpack.c.h.b16 %v1212
    %v1776 = vunpack.c.l.b16 %v1213
    %v1777 = vunpack.c.h.b16 %v1213
    %v1778 = vunpack.c.l.b16 %v1214
    %v1779 = vunpack.c.h.b16 %v1214
    %v1780 = vunpack.c.l.b16 %v1215
    %v1781 = vunpack.c.h.b16 %v1215
    %v1782 = vunpack.c.l.b16 %v1216
    %v1783 = vunpack.c.h.b16 %v1216
    %v1784 = vunpack.c.l.b16 %v1217
    %v1785 = vunpack.c.h.b16 %v1217
    %v1786 = vunpack.c.l.b16 %v1218
    %v1787 = vunpack.c.h.b16 %v1218
    %v1788 = vunpack.c.l.b16 %v1219
    %v1789 = vunpack.c.h.b16 %v1219
    %v1790 = vunpack.c.l.b16 %v1220
    %v1791 = vunpack.c.h.b16 %v1220
    %v1792 = vunpack.c.l.b16 %v1221
    %v1793 = vunpack.c.h.b16 %v1221
    %v1794 = vunpack.c.l.b16 %v1222
    %v1795 = vunpack.c.h.b16 %v1222
    %v1796 = vunpack.c.l.b16 %v1223
    %v1797 = vunpack.c.h.b16 %v1223
    %v1798 = vunpack.c.l.b16 %v1224
    %v1799 = vunpack.c.h.b16 %v1224
    %v1800 = vunpack.c.l.b16 %v1225
    %v1801 = vunpack.c.h.b16 %v1225
    %v1802 = vpack.c.b16 %v1422, %v1418
    %v1803 = vpack.c.b16 %v1423, %v1419
    %v1804 = vpack.c.b16 %v1424, %v1420
    %v1805 = vpack.c.b16 %v1425, %v1421
    %v1806 = vpack.c.b16 %v1430, %v1426
    %v1807 = vpack.c.b16 %v1431, %v1427
    %v1808 = vpack.c.b16 %v1432, %v1428
    %v1809 = vpack.c.b16 %v1433, %v1429
    %v1810 = vpack.c.b16 %v1438, %v1434
    %v1811 = vpack.c.b16 %v1439, %v1435
    %v1812 = vpack.c.b16 %v1440, %v1436
    %v1813 = vpack.c.b16 %v1441, %v1437
    %v1814 = vpack.c.b16 %v1446, %v1442
    %v1815 = vpack.c.b16 %v1447, %v1443
    %v1816 = vpack.c.b16 %v1448, %v1444
    %v1817 = vpack.c.b16 %v1449, %v1445
    %v1818 = vpack.c.b16 %v1454, %v1450
    %v1819 = vpack.c.b16 %v1455, %v1451
    %v1820 = vpack.c.b16 %v1456, %v1452
    %v1821 = vpack.c.b16 %v1457, %v1453
    %v1822 = vpack.c.b16 %v1462, %v1458
    %v1823 = vpack.c.b16 %v1463, %v1459
    %v1824 = vpack.c.b16 %v1464, %v1460
    %v1825 = vpack.c.b16 %v1465, %v1461
    %v1826 = vpack.c.b16 %v1470, %v1466
    %v1827 = vpack.c.b16 %v1471, %v1467
    %v1828 = vpack.c.b16 %v1472, %v1468
    %v1829 = vpack.c.b16 %v1473, %v1469
    %v1830 = vpack.c.b16 %v1478, %v1474
    %v1831 = vpack.c.b16 %v1479, %v1475
    %v1832 = vpack.c.b16 %v1480, %v1476
    %v1833 = vpack.c.b16 %v1481, %v1477
    %v1834 = vpack.c.b16 %v1486, %v1482
    %v1835 = vpack.c.b16 %v1487, %v1483
    %v1836 = vpack.c.b16 %v1488, %v1484
    %v1837 = vpack.c.b16 %v1489, %v1485
    %v1838 = vpack.c.b16 %v1494, %v1490
    %v1839 = vpack.c.b16 %v1495, %v1491
    %v1840 = vpack.c.b16 %v1496, %v1492
    %v1841 = vpack.c.b16 %v1497, %v1493
    %v1842 = vpack.c.b16 %v1502, %v1498
    %v1843 = vpack.c.b16 %v1503, %v1499
    %v1844 = vpack.c.b16 %v1504, %v1500
    %v1845 = vpack.c.b16 %v1505, %v1501
    %v1846 = vpack.c.b16 %v1510, %v1506
    %v1847 = vpack.c.b16 %v1511, %v1507
    %v1848 = vpack.c.b16 %v1512, %v1508
    %v1849 = vpack.c.b16 %v1513, %v1509
    %v1850 = vpack.c.b16 %v1518, %v1514
    %v1851 = vpack.c.b16 %v1519, %v1515
    %v1852 = vpack.c.b16 %v1520, %v1516
    %v1853 = vpack.c.b16 %v1521, %v1517
    %v1854 = vpack.c.b16 %v1526, %v1522
    %v1855 = vpack.c.b16 %v1527, %v1523
    %v1856 = vpack.c.b16 %v1528, %v1524
    %v1857 = vpack.c.b16 %v1529, %v1525
    %v1858 = vpack.c.b16 %v1534, %v1530
    %v1859 = vpack.c.b16 %v1535, %v1531
    %v1860 = vpack.c.b16 %v1536, %v1532
    %v1861 = vpack.c.b16 %v1537, %v1533
    %v1862 = vpack.c.b16 %v1542, %v1538
    %v1863 = vpack.c.b16 %v1543, %v1539
    %v1864 = vpack.c.b16 %v1544, %v1540
    %v1865 = vpack.c.b16 %v1545, %v1541
    %v1866 = vpack.c.b16 %v1550, %v1546
    %v1867 = vpack.c.b16 %v1551, %v1547
    %v1868 = vpack.c.b16 %v1552, %v1548
    %v1869 = vpack.c.b16 %v1553, %v1549
    %v1870 = vpack.c.b16 %v1558, %v1554
    %v1871 = vpack.c.b16 %v1559, %v1555
    %v1872 = vpack.c.b16 %v1560, %v1556
    %v1873 = vpack.c.b16 %v1561, %v1557
    %v1874 = vpack.c.b16 %v1566, %v1562
    %v1875 = vpack.c.b16 %v1567, %v1563
    %v1876 = vpack.c.b16 %v1568, %v1564
    %v1877 = vpack.c.b16 %v1569, %v1565
    %v1878 = vpack.c.b16 %v1574, %v1570
    %v1879 = vpack.c.b16 %v1575, %v1571
    %v1880 = vpack.c.b16 %v1576, %v1572
    %v1881 = vpack.c.b16 %v1577, %v1573
    %v1882 = vpack.c.b16 %v1582, %v1578
    %v1883 = vpack.c.b16 %v1583, %v1579
    %v1884 = vpack.c.b16 %v1584, %v1580
    %v1885 = vpack.c.b16 %v1585, %v1581
    %v1886 = vpack.c.b16 %v1590, %v1586
    %v1887 = vpack.c.b16 %v1591, %v1587
    %v1888 = vpack.c.b16 %v1592, %v1588
    %v1889 = vpack.c.b16 %v1593, %v1589
    %v1890 = vpack.c.b16 %v1598, %v1594
    %v1891 = vpack.c.b16 %v1599, %v1595
    %v1892 = vpack.c.b16 %v1600, %v1596
    %v1893 = vpack.c.b16 %v1601, %v1597
    %v1894 = vpack.c.b16 %v1606, %v1602
    %v1895 = vpack.c.b16 %v1607, %v1603
    %v1896 = vpack.c.b16 %v1608, %v1604
    %v1897 = vpack.c.b16 %v1609, %v1605
    %v1898 = vpack.c.b16 %v1614, %v1610
    %v1899 = vpack.c.b16 %v1615, %v1611
    %v1900 = vpack.c.b16 %v1616, %v1612
    %v1901 = vpack.c.b16 %v1617, %v1613
    %v1902 = vpack.c.b16 %v1622, %v1618
    %v1903 = vpack.c.b16 %v1623, %v1619
    %v1904 = vpack.c.b16 %v1624, %v1620
    %v1905 = vpack.c.b16 %v1625, %v1621
    %v1906 = vpack.c.b16 %v1630, %v1626
    %v1907 = vpack.c.b16 %v1631, %v1627
    %v1908 = vpack.c.b16 %v1632, %v1628
    %v1909 = vpack.c.b16 %v1633, %v1629
    %v1910 = vpack.c.b16 %v1638, %v1634
    %v1911 = vpack.c.b16 %v1639, %v1635
    %v1912 = vpack.c.b16 %v1640, %v1636
    %v1913 = vpack.c.b16 %v1641, %v1637
    %v1914 = vpack.c.b16 %v1646, %v1642
    %v1915 = vpack.c.b16 %v1647, %v1643
    %v1916 = vpack.c.b16 %v1648, %v1644
    %v1917 = vpack.c.b16 %v1649, %v1645
    %v1918 = vpack.c.b16 %v1654, %v1650
    %v1919 = vpack.c.b16 %v1655, %v1651
    %v1920 = vpack.c.b16 %v1656, %v1652
    %v1921 = vpack.c.b16 %v1657, %v1653
    %v1922 = vpack.c.b16 %v1662, %v1658
    %v1923 = vpack.c.b16 %v1663, %v1659
    %v1924 = vpack.c.b16 %v1664, %v1660
    %v1925 = vpack.c.b16 %v1665, %v1661
    %v1926 = vpack.c.b16 %v1670, %v1666
    %v1927 = vpack.c.b16 %v1671, %v1667
    %v1928 = vpack.c.b16 %v1672, %v1668
    %v1929 = vpack.c.b16 %v1673, %v1669
    %v1930 = vpack.c.b16 %v1678, %v1674
    %v1931 = vpack.c.b16 %v1679, %v1675
    %v1932 = vpack.c.b16 %v1680, %v1676
    %v1933 = vpack.c.b16 %v1681, %v1677
    %v1934 = vpack.c.b16 %v1686, %v1682
    %v1935 = vpack.c.b16 %v1687, %v1683
    %v1936 = vpack.c.b16 %v1688, %v1684
    %v1937 = vpack.c.b16 %v1689, %v1685
    %v1938 = vpack.c.b16 %v1694, %v1690
    %v1939 = vpack.c.b16 %v1695, %v1691
    %v1940 = vpack.c.b16 %v1696, %v1692
    %v1941 = vpack.c.b16 %v1697, %v1693
    %v1942 = vpack.c.b16 %v1702, %v1698
    %v1943 = vpack.c.b16 %v1703, %v1699
    %v1944 = vpack.c.b16 %v1704, %v1700
    %v1945 = vpack.c.b16 %v1705, %v1701
    %v1946 = vpack.c.b16 %v1710, %v1706
    %v1947 = vpack.c.b16 %v1711, %v1707
    %v1948 = vpack.c.b16 %v1712, %v1708
    %v1949 = vpack.c.b16 %v1713, %v1709
    %v1950 = vpack.c.b16 %v1718, %v1714
    %v1951 = vpack.c.b16 %v1719, %v1715
    %v1952 = vpack.c.b16 %v1720, %v1716
    %v1953 = vpack.c.b16 %v1721, %v1717
    %v1954 = vpack.c.b16 %v1726, %v1722
    %v1955 = vpack.c.b16 %v1727, %v1723
    %v1956 = vpack.c.b16 %v1728, %v1724
    %v1957 = vpack.c.b16 %v1729, %v1725
    %v1958 = vpack.c.b16 %v1734, %v1730
    %v1959 = vpack.c.b16 %v1735, %v1731
    %v1960 = vpack.c.b16 %v1736, %v1732
    %v1961 = vpack.c.b16 %v1737, %v1733
    %v1962 = vpack.c.b16 %v1742, %v1738
    %v1963 = vpack.c.b16 %v1743, %v1739
    %v1964 = vpack.c.b16 %v1744, %v1740
    %v1965 = vpack.c.b16 %v1745, %v1741
    %v1966 = vpack.c.b16 %v1750, %v1746
    %v1967 = vpack.c.b16 %v1751, %v1747
    %v1968 = vpack.c.b16 %v1752, %v1748
    %v1969 = vpack.c.b16 %v1753, %v1749
    %v1970 = vpack.c.b16 %v1758, %v1754
    %v1971 = vpack.c.b16 %v1759, %v1755
    %v1972 = vpack.c.b16 %v1760, %v1756
    %v1973 = vpack.c.b16 %v1761, %v1757
    %v1974 = vpack.c.b16 %v1766, %v1762
    %v1975 = vpack.c.b16 %v1767, %v1763
    %v1976 = vpack.c.b16 %v1768, %v1764
    %v1977 = vpack.c.b16 %v1769, %v1765
    %v1978 = vpack.c.b16 %v1774, %v1770
    %v1979 = vpack.c.b16 %v1775, %v1771
    %v1980 = vpack.c.b16 %v1776, %v1772
    %v1981 = vpack.c.b16 %v1777, %v1773
    %v1982 = vpack.c.b16 %v1782, %v1778
    %v1983 = vpack.c.b16 %v1783, %v1779
    %v1984 = vpack.c.b16 %v1784, %v1780
    %v1985 = vpack.c.b16 %v1785, %v1781
    %v1986 = vpack.c.b16 %v1790, %v1786
    %v1987 = vpack.c.b16 %v1791, %v1787
    %v1988 = vpack.c.b16 %v1792, %v1788
    %v1989 = vpack.c.b16 %v1793, %v1789
    %v1990 = vpack.c.b16 %v1798, %v1794
    %v1991 = vpack.c.b16 %v1799, %v1795
    %v1992 = vpack.c.b16 %v1800, %v1796
    %v1993 = vpack.c.b16 %v1801, %v1797
    %2186 = vmatprep.subr.bf16.mxu0 %v1803
    %2187 = vmatpush1.bf16.msra.mxu0 %v1802
    %2188 = vmatprep.subr.bf16.mxu0 %v1807
    %2189 = vmatpush1.bf16.msra.mxu0 %v1806
    %2190 = vmatprep.subr.bf16.mxu0 %v1811
    %2191 = vmatpush1.bf16.msra.mxu0 %v1810
    %2192 = vmatprep.subr.bf16.mxu0 %v1815
    %2193 = vmatpush1.bf16.msra.mxu0 %v1814
    %2194 = vmatprep.subr.bf16.mxu0 %v1819
    %2195 = vmatpush1.bf16.msra.mxu0 %v1818
    %2196 = vmatprep.subr.bf16.mxu0 %v1823
    %2197 = vmatpush1.bf16.msra.mxu0 %v1822
    %2198 = vmatprep.subr.bf16.mxu0 %v1827
    %2199 = vmatpush1.bf16.msra.mxu0 %v1826
    %2200 = vmatprep.subr.bf16.mxu0 %v1831
    %2201 = vmatpush1.bf16.msra.mxu0 %v1830
    %2202 = vmatprep.subr.bf16.mxu0 %v1835
    %2203 = vmatpush1.bf16.msra.mxu0 %v1834
    %2204 = vmatprep.subr.bf16.mxu0 %v1839
    %2205 = vmatpush1.bf16.msra.mxu0 %v1838
    %2206 = vmatprep.subr.bf16.mxu0 %v1843
    %2207 = vmatpush1.bf16.msra.mxu0 %v1842
    %2208 = vmatprep.subr.bf16.mxu0 %v1847
    %2209 = vmatpush1.bf16.msra.mxu0 %v1846
    %2210 = vmatprep.subr.bf16.mxu0 %v1851
    %2211 = vmatpush1.bf16.msra.mxu0 %v1850
    %2212 = vmatprep.subr.bf16.mxu0 %v1855
    %2213 = vmatpush1.bf16.msra.mxu0 %v1854
    %2214 = vmatprep.subr.bf16.mxu0 %v1859
    %2215 = vmatpush1.bf16.msra.mxu0 %v1858
    %2216 = vmatprep.subr.bf16.mxu0 %v1863
    %2217 = vmatpush1.bf16.msra.mxu0 %v1862
    %2218 = vmatprep.mubr.bf16.mxu0 %v1023
    %2219 = vmatmul.mubr.bf16.gmra.mrb[0].mxu0 %v1022
    %v2220 = vpop.f32.mrb[0].mxu0
    %v2221 = vadd.f32 0.0, %v2220
    %v2222 = vpop.f32.mrb[0].mxu0
    %v2223 = vadd.f32 0.0, %v2222
    %v2224 = vpop.f32.mrb[0].mxu0
    %v2225 = vadd.f32 0.0, %v2224
    %v2226 = vpop.f32.mrb[0].mxu0
    %v2227 = vadd.f32 0.0, %v2226
    %2228 = vdwg.mxu0
    %2229 = vmatprep.subr.bf16.mxu0 %v1867
    %2230 = vmatpush1.bf16.msra.mxu0 %v1866
    %2231 = vmatprep.subr.bf16.mxu0 %v1871
    %2232 = vmatpush1.bf16.msra.mxu0 %v1870
    %2233 = vmatprep.subr.bf16.mxu0 %v1875
    %2234 = vmatpush1.bf16.msra.mxu0 %v1874
    %2235 = vmatprep.subr.bf16.mxu0 %v1879
    %2236 = vmatpush1.bf16.msra.mxu0 %v1878
    %2237 = vmatprep.subr.bf16.mxu0 %v1883
    %2238 = vmatpush1.bf16.msra.mxu0 %v1882
    %2239 = vmatprep.subr.bf16.mxu0 %v1887
    %2240 = vmatpush1.bf16.msra.mxu0 %v1886
    %2241 = vmatprep.subr.bf16.mxu0 %v1891
    %2242 = vmatpush1.bf16.msra.mxu0 %v1890
    %2243 = vmatprep.subr.bf16.mxu0 %v1895
    %2244 = vmatpush1.bf16.msra.mxu0 %v1894
    %2245 = vmatprep.subr.bf16.mxu0 %v1899
    %2246 = vmatpush1.bf16.msra.mxu0 %v1898
    %2247 = vmatprep.subr.bf16.mxu0 %v1903
    %2248 = vmatpush1.bf16.msra.mxu0 %v1902
    %2249 = vmatprep.subr.bf16.mxu0 %v1907
    %2250 = vmatpush1.bf16.msra.mxu0 %v1906
    %2251 = vmatprep.subr.bf16.mxu0 %v1911
    %2252 = vmatpush1.bf16.msra.mxu0 %v1910
    %2253 = vmatprep.subr.bf16.mxu0 %v1915
    %2254 = vmatpush1.bf16.msra.mxu0 %v1914
    %2255 = vmatprep.subr.bf16.mxu0 %v1919
    %2256 = vmatpush1.bf16.msra.mxu0 %v1918
    %2257 = vmatprep.subr.bf16.mxu0 %v1923
    %2258 = vmatpush1.bf16.msra.mxu0 %v1922
    %2259 = vmatprep.subr.bf16.mxu0 %v1927
    %2260 = vmatpush1.bf16.msra.mxu0 %v1926
    %2261 = vmatprep.mubr.bf16.mxu0 %v1027
    %2262 = vmatmul.mubr.bf16.gmra.mrb[0].mxu0 %v1026
    %v2263 = vpop.f32.mrb[0].mxu0
    %v2264 = vadd.f32 %v2221, %v2263
    %v2265 = vpop.f32.mrb[0].mxu0
    %v2266 = vadd.f32 %v2223, %v2265
    %v2267 = vpop.f32.mrb[0].mxu0
    %v2268 = vadd.f32 %v2225, %v2267
    %v2269 = vpop.f32.mrb[0].mxu0
    %v2270 = vadd.f32 %v2227, %v2269
    %2271 = vdwg.mxu0
    %2272 = vmatprep.subr.bf16.mxu0 %v1931
    %2273 = vmatpush1.bf16.msra.mxu0 %v1930
    %2274 = vmatprep.subr.bf16.mxu0 %v1935
    %2275 = vmatpush1.bf16.msra.mxu0 %v1934
    %2276 = vmatprep.subr.bf16.mxu0 %v1939
    %2277 = vmatpush1.bf16.msra.mxu0 %v1938
    %2278 = vmatprep.subr.bf16.mxu0 %v1943
    %2279 = vmatpush1.bf16.msra.mxu0 %v1942
    %2280 = vmatprep.subr.bf16.mxu0 %v1947
    %2281 = vmatpush1.bf16.msra.mxu0 %v1946
    %2282 = vmatprep.subr.bf16.mxu0 %v1951
    %2283 = vmatpush1.bf16.msra.mxu0 %v1950
    %2284 = vmatprep.subr.bf16.mxu0 %v1955
    %2285 = vmatpush1.bf16.msra.mxu0 %v1954
    %2286 = vmatprep.subr.bf16.mxu0 %v1959
    %2287 = vmatpush1.bf16.msra.mxu0 %v1958
    %2288 = vmatprep.subr.bf16.mxu0 %v1963
    %2289 = vmatpush1.bf16.msra.mxu0 %v1962
    %2290 = vmatprep.subr.bf16.mxu0 %v1967
    %2291 = vmatpush1.bf16.msra.mxu0 %v1966
    %2292 = vmatprep.subr.bf16.mxu0 %v1971
    %2293 = vmatpush1.bf16.msra.mxu0 %v1970
    %2294 = vmatprep.subr.bf16.mxu0 %v1975
    %2295 = vmatpush1.bf16.msra.mxu0 %v1974
    %2296 = vmatprep.subr.bf16.mxu0 %v1979
    %2297 = vmatpush1.bf16.msra.mxu0 %v1978
    %2298 = vmatprep.subr.bf16.mxu0 %v1983
    %2299 = vmatpush1.bf16.msra.mxu0 %v1982
    %2300 = vmatprep.subr.bf16.mxu0 %v1987
    %2301 = vmatpush1.bf16.msra.mxu0 %v1986
    %2302 = vmatprep.subr.bf16.mxu0 %v1991
    %2303 = vmatpush1.bf16.msra.mxu0 %v1990
    %2304 = vmatprep.mubr.bf16.mxu0 %v1031
    %2305 = vmatmul.mubr.bf16.gmra.mrb[0].mxu0 %v1030
    %v2306 = vpop.f32.mrb[0].mxu0
    %v2307 = vadd.f32 %v2264, %v2306
    %v2308 = vpop.f32.mrb[0].mxu0
    %v2309 = vadd.f32 %v2266, %v2308
    %v2310 = vpop.f32.mrb[0].mxu0
    %v2311 = vadd.f32 %v2268, %v2310
    %v2312 = vpop.f32.mrb[0].mxu0
    %v2313 = vadd.f32 %v2270, %v2312
    %2314 = vdwg.mxu0
    %2315 = vmatprep.subr.bf16.mxu0 %v1805
    %2316 = vmatpush1.bf16.msra.mxu0 %v1804
    %2317 = vmatprep.subr.bf16.mxu0 %v1809
    %2318 = vmatpush1.bf16.msra.mxu0 %v1808
    %2319 = vmatprep.subr.bf16.mxu0 %v1813
    %2320 = vmatpush1.bf16.msra.mxu0 %v1812
    %2321 = vmatprep.subr.bf16.mxu0 %v1817
    %2322 = vmatpush1.bf16.msra.mxu0 %v1816
    %2323 = vmatprep.subr.bf16.mxu0 %v1821
    %2324 = vmatpush1.bf16.msra.mxu0 %v1820
    %2325 = vmatprep.subr.bf16.mxu0 %v1825
    %2326 = vmatpush1.bf16.msra.mxu0 %v1824
    %2327 = vmatprep.subr.bf16.mxu0 %v1829
    %2328 = vmatpush1.bf16.msra.mxu0 %v1828
    %2329 = vmatprep.subr.bf16.mxu0 %v1833
    %2330 = vmatpush1.bf16.msra.mxu0 %v1832
    %2331 = vmatprep.subr.bf16.mxu0 %v1837
    %2332 = vmatpush1.bf16.msra.mxu0 %v1836
    %2333 = vmatprep.subr.bf16.mxu0 %v1841
    %2334 = vmatpush1.bf16.msra.mxu0 %v1840
    %2335 = vmatprep.subr.bf16.mxu0 %v1845
    %2336 = vmatpush1.bf16.msra.mxu0 %v1844
    %2337 = vmatprep.subr.bf16.mxu0 %v1849
    %2338 = vmatpush1.bf16.msra.mxu0 %v1848
    %2339 = vmatprep.subr.bf16.mxu0 %v1853
    %2340 = vmatpush1.bf16.msra.mxu0 %v1852
    %2341 = vmatprep.subr.bf16.mxu0 %v1857
    %2342 = vmatpush1.bf16.msra.mxu0 %v1856
    %2343 = vmatprep.subr.bf16.mxu0 %v1861
    %2344 = vmatpush1.bf16.msra.mxu0 %v1860
    %2345 = vmatprep.subr.bf16.mxu0 %v1865
    %2346 = vmatpush1.bf16.msra.mxu0 %v1864
    %2347 = vmatprep.mubr.bf16.mxu0 %v1023
    %2348 = vmatmul.mubr.bf16.gmra.mrb[0].mxu0 %v1022
    %v2349 = vpop.f32.mrb[0].mxu0
    %v2350 = vadd.f32 0.0, %v2349
    %v2351 = vpop.f32.mrb[0].mxu0
    %v2352 = vadd.f32 0.0, %v2351
    %v2353 = vpop.f32.mrb[0].mxu0
    %v2354 = vadd.f32 0.0, %v2353
    %v2355 = vpop.f32.mrb[0].mxu0
    %v2356 = vadd.f32 0.0, %v2355
    %2357 = vdwg.mxu0
    %2358 = vmatprep.subr.bf16.mxu0 %v1869
    %2359 = vmatpush1.bf16.msra.mxu0 %v1868
    %2360 = vmatprep.subr.bf16.mxu0 %v1873
    %2361 = vmatpush1.bf16.msra.mxu0 %v1872
    %2362 = vmatprep.subr.bf16.mxu0 %v1877
    %2363 = vmatpush1.bf16.msra.mxu0 %v1876
    %2364 = vmatprep.subr.bf16.mxu0 %v1881
    %2365 = vmatpush1.bf16.msra.mxu0 %v1880
    %2366 = vmatprep.subr.bf16.mxu0 %v1885
    %2367 = vmatpush1.bf16.msra.mxu0 %v1884
    %2368 = vmatprep.subr.bf16.mxu0 %v1889
    %2369 = vmatpush1.bf16.msra.mxu0 %v1888
    %2370 = vmatprep.subr.bf16.mxu0 %v1893
    %2371 = vmatpush1.bf16.msra.mxu0 %v1892
    %2372 = vmatprep.subr.bf16.mxu0 %v1897
    %2373 = vmatpush1.bf16.msra.mxu0 %v1896
    %2374 = vmatprep.subr.bf16.mxu0 %v1901
    %2375 = vmatpush1.bf16.msra.mxu0 %v1900
    %2376 = vmatprep.subr.bf16.mxu0 %v1905
    %2377 = vmatpush1.bf16.msra.mxu0 %v1904
    %2378 = vmatprep.subr.bf16.mxu0 %v1909
    %2379 = vmatpush1.bf16.msra.mxu0 %v1908
    %2380 = vmatprep.subr.bf16.mxu0 %v1913
    %2381 = vmatpush1.bf16.msra.mxu0 %v1912
    %2382 = vmatprep.subr.bf16.mxu0 %v1917
    %2383 = vmatpush1.bf16.msra.mxu0 %v1916
    %2384 = vmatprep.subr.bf16.mxu0 %v1921
    %2385 = vmatpush1.bf16.msra.mxu0 %v1920
    %2386 = vmatprep.subr.bf16.mxu0 %v1925
    %2387 = vmatpush1.bf16.msra.mxu0 %v1924
    %2388 = vmatprep.subr.bf16.mxu0 %v1929
    %2389 = vmatpush1.bf16.msra.mxu0 %v1928
    %2390 = vmatprep.mubr.bf16.mxu0 %v1027
    %2391 = vmatmul.mubr.bf16.gmra.mrb[0].mxu0 %v1026
    %v2392 = vpop.f32.mrb[0].mxu0
    %v2393 = vadd.f32 %v2350, %v2392
    %v2394 = vpop.f32.mrb[0].mxu0
    %v2395 = vadd.f32 %v2352, %v2394
    %v2396 = vpop.f32.mrb[0].mxu0
    %v2397 = vadd.f32 %v2354, %v2396
    %v2398 = vpop.f32.mrb[0].mxu0
    %v2399 = vadd.f32 %v2356, %v2398
    %2400 = vdwg.mxu0
    %2401 = vmatprep.subr.bf16.mxu0 %v1933
    %2402 = vmatpush1.bf16.msra.mxu0 %v1932
    %2403 = vmatprep.subr.bf16.mxu0 %v1937
    %2404 = vmatpush1.bf16.msra.mxu0 %v1936
    %2405 = vmatprep.subr.bf16.mxu0 %v1941
    %2406 = vmatpush1.bf16.msra.mxu0 %v1940
    %2407 = vmatprep.subr.bf16.mxu0 %v1945
    %2408 = vmatpush1.bf16.msra.mxu0 %v1944
    %2409 = vmatprep.subr.bf16.mxu0 %v1949
    %2410 = vmatpush1.bf16.msra.mxu0 %v1948
    %2411 = vmatprep.subr.bf16.mxu0 %v1953
    %2412 = vmatpush1.bf16.msra.mxu0 %v1952
    %2413 = vmatprep.subr.bf16.mxu0 %v1957
    %2414 = vmatpush1.bf16.msra.mxu0 %v1956
    %2415 = vmatprep.subr.bf16.mxu0 %v1961
    %2416 = vmatpush1.bf16.msra.mxu0 %v1960
    %2417 = vmatprep.subr.bf16.mxu0 %v1965
    %2418 = vmatpush1.bf16.msra.mxu0 %v1964
    %2419 = vmatprep.subr.bf16.mxu0 %v1969
    %2420 = vmatpush1.bf16.msra.mxu0 %v1968
    %2421 = vmatprep.subr.bf16.mxu0 %v1973
    %2422 = vmatpush1.bf16.msra.mxu0 %v1972
    %2423 = vmatprep.subr.bf16.mxu0 %v1977
    %2424 = vmatpush1.bf16.msra.mxu0 %v1976
    %2425 = vmatprep.subr.bf16.mxu0 %v1981
    %2426 = vmatpush1.bf16.msra.mxu0 %v1980
    %2427 = vmatprep.subr.bf16.mxu0 %v1985
    %2428 = vmatpush1.bf16.msra.mxu0 %v1984
    %2429 = vmatprep.subr.bf16.mxu0 %v1989
    %2430 = vmatpush1.bf16.msra.mxu0 %v1988
    %2431 = vmatprep.subr.bf16.mxu0 %v1993
    %2432 = vmatpush1.bf16.msra.mxu0 %v1992
    %2433 = vmatprep.mubr.bf16.mxu0 %v1031
    %2434 = vmatmul.mubr.bf16.gmra.mrb[0].mxu0 %v1030
    %v2435 = vpop.f32.mrb[0].mxu0
    %v2436 = vadd.f32 %v2393, %v2435
    %v2437 = vpop.f32.mrb[0].mxu0
    %v2438 = vadd.f32 %v2395, %v2437
    %v2439 = vpop.f32.mrb[0].mxu0
    %v2440 = vadd.f32 %v2397, %v2439
    %v2441 = vpop.f32.mrb[0].mxu0
    %v2442 = vadd.f32 %v2399, %v2441
    %2443 = vdwg.mxu0
    %v2444 = vmax.f32 %v2307, %v2309
    %v2445 = vmax.f32 %v2311, %v2313
    %v2446 = vmax.f32 %v2436, %v2438
    %v2447 = vmax.f32 %v2440, %v2442
    %v2448 = vmax.f32 %v2444, %v2446
    %v2449 = vmax.f32 %v2445, %v2447
    %v2450 = vld [vmem:[%s4] sm:$0x1]
    %v2452 = vlaneseq
    %v2453 = vshrl.u32 %v2452, 7
    %v2454 = vsub.s32 0, %v2453
    %v2455 = vrot.slane %v2450, %v2454
    %v2457 = vadd.f32 %v2448, %v2455
    %v2458 = vadd.f32 %v2449, %v2455
    %v2459 = vmax.f32 %v2457, 0.0
    %v2460 = vmax.f32 %v2458, 0.0
    %v2461 = vpack.c.bf16 %v2460, %v2459
    %v2463 = vrot.slane %v2461, 1
    %v2465 = vrot.slane %v2461, 2
    %v2467 = vrot.slane %v2461, 3
    %v2469 = vrot.slane %v2461, 4
    %v2471 = vld [vmem:[%s5] sm:$0xf]
    %v2472 = vld [vmem:[%s5 + $0x4] sm:$0xf]
    %v2473 = vld [vmem:[%s5 + $0x8] sm:$0xf]
    %v2474 = vld [vmem:[%s5 + $0xc] sm:$0xf]
    %v2475 = vld [vmem:[%s5 + $0x10] sm:$0xf]
    %v2476 = vld [vmem:[%s5 + $0x14] sm:$0xf]
    %v2477 = vld [vmem:[%s5 + $0x18] sm:$0xf]
    %v2478 = vld [vmem:[%s5 + $0x1c] sm:$0xf]
    %v2479 = vld [vmem:[%s5 + $0x20] sm:$0xf]
    %v2480 = vld [vmem:[%s5 + $0x24] sm:$0xf]
    %v2481 = vld [vmem:[%s5 + $0x28] sm:$0xf]
    %v2482 = vld [vmem:[%s5 + $0x2c] sm:$0xf]
    %v2483 = vld [vmem:[%s5 + $0x30] sm:$0xf]
    %v2484 = vld [vmem:[%s5 + $0x34] sm:$0xf]
    %v2485 = vld [vmem:[%s5 + $0x38] sm:$0xf]
    %v2486 = vld [vmem:[%s5 + $0x3c] sm:$0xf]
    %v2487 = vld [vmem:[%s5 + $0x40] sm:$0xf]
    %v2488 = vld [vmem:[%s5 + $0x44] sm:$0xf]
    %v2489 = vld [vmem:[%s5 + $0x48] sm:$0xf]
    %v2490 = vld [vmem:[%s5 + $0x4c] sm:$0xf]
    %v2491 = vld [vmem:[%s5 + $0x50] sm:$0xf]
    %v2492 = vld [vmem:[%s5 + $0x54] sm:$0xf]
    %v2493 = vld [vmem:[%s5 + $0x58] sm:$0xf]
    %v2494 = vld [vmem:[%s5 + $0x5c] sm:$0xf]
    %v2495 = vld [vmem:[%s5 + $0x60] sm:$0xf]
    %v2496 = vld [vmem:[%s5 + $0x64] sm:$0xf]
    %v2497 = vld [vmem:[%s5 + $0x68] sm:$0xf]
    %v2498 = vld [vmem:[%s5 + $0x6c] sm:$0xf]
    %v2499 = vld [vmem:[%s5 + $0x70] sm:$0xf]
    %v2500 = vld [vmem:[%s5 + $0x74] sm:$0xf]
    %v2501 = vld [vmem:[%s5 + $0x78] sm:$0xf]
    %v2502 = vld [vmem:[%s5 + $0x7c] sm:$0xf]
    %v2503 = vld [vmem:[%s5 + $0x80] sm:$0xf]
    %v2504 = vld [vmem:[%s5 + $0x84] sm:$0xf]
    %v2505 = vld [vmem:[%s5 + $0x88] sm:$0xf]
    %v2506 = vld [vmem:[%s5 + $0x8c] sm:$0xf]
    %v2507 = vld [vmem:[%s5 + $0x90] sm:$0xf]
    %v2508 = vld [vmem:[%s5 + $0x94] sm:$0xf]
    %v2509 = vld [vmem:[%s5 + $0x98] sm:$0xf]
    %v2510 = vld [vmem:[%s5 + $0x9c] sm:$0xf]
    %v2511 = vld [vmem:[%s5 + $0xa0] sm:$0xf]
    %v2512 = vld [vmem:[%s5 + $0xa4] sm:$0xf]
    %v2513 = vld [vmem:[%s5 + $0xa8] sm:$0xf]
    %v2514 = vld [vmem:[%s5 + $0xac] sm:$0xf]
    %v2515 = vld [vmem:[%s5 + $0xb0] sm:$0xf]
    %v2516 = vld [vmem:[%s5 + $0xb4] sm:$0xf]
    %v2517 = vld [vmem:[%s5 + $0xb8] sm:$0xf]
    %v2518 = vld [vmem:[%s5 + $0xbc] sm:$0xf]
    %v2519 = vld [vmem:[%s5 + $0xc0] sm:$0xf]
    %v2520 = vld [vmem:[%s5 + $0xc4] sm:$0xf]
    %v2521 = vld [vmem:[%s5 + $0xc8] sm:$0xf]
    %v2522 = vld [vmem:[%s5 + $0xcc] sm:$0xf]
    %v2523 = vld [vmem:[%s5 + $0xd0] sm:$0xf]
    %v2524 = vld [vmem:[%s5 + $0xd4] sm:$0xf]
    %v2525 = vld [vmem:[%s5 + $0xd8] sm:$0xf]
    %v2526 = vld [vmem:[%s5 + $0xdc] sm:$0xf]
    %v2527 = vld [vmem:[%s5 + $0xe0] sm:$0xf]
    %v2528 = vld [vmem:[%s5 + $0xe4] sm:$0xf]
    %v2529 = vld [vmem:[%s5 + $0xe8] sm:$0xf]
    %v2530 = vld [vmem:[%s5 + $0xec] sm:$0xf]
    %v2531 = vld [vmem:[%s5 + $0xf0] sm:$0xf]
    %v2532 = vld [vmem:[%s5 + $0xf4] sm:$0xf]
    %v2533 = vld [vmem:[%s5 + $0xf8] sm:$0xf]
    %v2534 = vld [vmem:[%s5 + $0xfc] sm:$0xf]
    %v2535 = vld [vmem:[%s5 + $0x100] sm:$0xf]
    %v2536 = vld [vmem:[%s5 + $0x104] sm:$0xf]
    %v2537 = vld [vmem:[%s5 + $0x108] sm:$0xf]
    %v2538 = vld [vmem:[%s5 + $0x10c] sm:$0xf]
    %v2539 = vld [vmem:[%s5 + $0x110] sm:$0xf]
    %v2540 = vld [vmem:[%s5 + $0x114] sm:$0xf]
    %v2541 = vld [vmem:[%s5 + $0x118] sm:$0xf]
    %v2542 = vld [vmem:[%s5 + $0x11c] sm:$0xf]
    %v2543 = vld [vmem:[%s5 + $0x120] sm:$0xf]
    %v2544 = vld [vmem:[%s5 + $0x124] sm:$0xf]
    %v2545 = vld [vmem:[%s5 + $0x128] sm:$0xf]
    %v2546 = vld [vmem:[%s5 + $0x12c] sm:$0xf]
    %v2547 = vld [vmem:[%s5 + $0x130] sm:$0xf]
    %v2548 = vld [vmem:[%s5 + $0x134] sm:$0xf]
    %v2549 = vld [vmem:[%s5 + $0x138] sm:$0xf]
    %v2550 = vld [vmem:[%s5 + $0x13c] sm:$0xf]
    %v2551 = vld [vmem:[%s6] sm:$0x1]
    %v2553 = vlaneseq
    %v2554 = vshrl.u32 %v2553, 7
    %v2555 = vsub.s32 0, %v2554
    %v2556 = vrot.slane %v2551, %v2555
    %v2638 = vunpack.c.l.b16 %v2471
    %v2639 = vunpack.c.l.b16 %v2472
    %v2640 = vunpack.c.l.b16 %v2473
    %v2641 = vunpack.c.l.b16 %v2474
    %v2642 = vunpack.c.l.b16 %v2475
    %v2643 = vunpack.c.l.b16 %v2476
    %v2644 = vunpack.c.l.b16 %v2477
    %v2645 = vunpack.c.l.b16 %v2478
    %v2646 = vunpack.c.l.b16 %v2479
    %v2647 = vunpack.c.l.b16 %v2480
    %v2648 = vunpack.c.l.b16 %v2481
    %v2649 = vunpack.c.l.b16 %v2482
    %v2650 = vunpack.c.l.b16 %v2483
    %v2651 = vunpack.c.l.b16 %v2484
    %v2652 = vunpack.c.l.b16 %v2485
    %v2653 = vunpack.c.l.b16 %v2486
    %v2654 = vunpack.c.l.b16 %v2487
    %v2655 = vunpack.c.l.b16 %v2488
    %v2656 = vunpack.c.l.b16 %v2489
    %v2657 = vunpack.c.l.b16 %v2490
    %v2658 = vunpack.c.l.b16 %v2491
    %v2659 = vunpack.c.l.b16 %v2492
    %v2660 = vunpack.c.l.b16 %v2493
    %v2661 = vunpack.c.l.b16 %v2494
    %v2662 = vunpack.c.l.b16 %v2495
    %v2663 = vunpack.c.l.b16 %v2496
    %v2664 = vunpack.c.l.b16 %v2497
    %v2665 = vunpack.c.l.b16 %v2498
    %v2666 = vunpack.c.l.b16 %v2499
    %v2667 = vunpack.c.l.b16 %v2500
    %v2668 = vunpack.c.l.b16 %v2501
    %v2669 = vunpack.c.l.b16 %v2502
    %v2670 = vunpack.c.l.b16 %v2503
    %v2671 = vunpack.c.l.b16 %v2504
    %v2672 = vunpack.c.l.b16 %v2505
    %v2673 = vunpack.c.l.b16 %v2506
    %v2674 = vunpack.c.l.b16 %v2507
    %v2675 = vunpack.c.l.b16 %v2508
    %v2676 = vunpack.c.l.b16 %v2509
    %v2677 = vunpack.c.l.b16 %v2510
    %v2678 = vunpack.c.l.b16 %v2511
    %v2679 = vunpack.c.l.b16 %v2512
    %v2680 = vunpack.c.l.b16 %v2513
    %v2681 = vunpack.c.l.b16 %v2514
    %v2682 = vunpack.c.l.b16 %v2515
    %v2683 = vunpack.c.l.b16 %v2516
    %v2684 = vunpack.c.l.b16 %v2517
    %v2685 = vunpack.c.l.b16 %v2518
    %v2686 = vunpack.c.l.b16 %v2519
    %v2687 = vunpack.c.l.b16 %v2520
    %v2688 = vunpack.c.l.b16 %v2521
    %v2689 = vunpack.c.l.b16 %v2522
    %v2690 = vunpack.c.l.b16 %v2523
    %v2691 = vunpack.c.l.b16 %v2524
    %v2692 = vunpack.c.l.b16 %v2525
    %v2693 = vunpack.c.l.b16 %v2526
    %v2694 = vunpack.c.l.b16 %v2527
    %v2695 = vunpack.c.l.b16 %v2528
    %v2696 = vunpack.c.l.b16 %v2529
    %v2697 = vunpack.c.l.b16 %v2530
    %v2698 = vunpack.c.l.b16 %v2531
    %v2699 = vunpack.c.l.b16 %v2532
    %v2700 = vunpack.c.l.b16 %v2533
    %v2701 = vunpack.c.l.b16 %v2534
    %v2702 = vunpack.c.l.b16 %v2535
    %v2703 = vunpack.c.l.b16 %v2536
    %v2704 = vunpack.c.l.b16 %v2537
    %v2705 = vunpack.c.l.b16 %v2538
    %v2706 = vunpack.c.l.b16 %v2539
    %v2707 = vunpack.c.l.b16 %v2540
    %v2708 = vunpack.c.l.b16 %v2541
    %v2709 = vunpack.c.l.b16 %v2542
    %v2710 = vunpack.c.l.b16 %v2543
    %v2711 = vunpack.c.l.b16 %v2544
    %v2712 = vunpack.c.l.b16 %v2545
    %v2713 = vunpack.c.l.b16 %v2546
    %v2714 = vunpack.c.l.b16 %v2547
    %v2715 = vunpack.c.l.b16 %v2548
    %v2716 = vunpack.c.l.b16 %v2549
    %v2717 = vunpack.c.l.b16 %v2550
    %v2718 = vpack.c.b16 %v2639, %v2638
    %v2719 = vpack.c.b16 %v2641, %v2640
    %v2720 = vpack.c.b16 %v2643, %v2642
    %v2721 = vpack.c.b16 %v2645, %v2644
    %v2722 = vpack.c.b16 %v2647, %v2646
    %v2723 = vpack.c.b16 %v2649, %v2648
    %v2724 = vpack.c.b16 %v2651, %v2650
    %v2725 = vpack.c.b16 %v2653, %v2652
    %v2726 = vpack.c.b16 %v2655, %v2654
    %v2727 = vpack.c.b16 %v2657, %v2656
    %v2728 = vpack.c.b16 %v2659, %v2658
    %v2729 = vpack.c.b16 %v2661, %v2660
    %v2730 = vpack.c.b16 %v2663, %v2662
    %v2731 = vpack.c.b16 %v2665, %v2664
    %v2732 = vpack.c.b16 %v2667, %v2666
    %v2733 = vpack.c.b16 %v2669, %v2668
    %v2734 = vpack.c.b16 %v2671, %v2670
    %v2735 = vpack.c.b16 %v2673, %v2672
    %v2736 = vpack.c.b16 %v2675, %v2674
    %v2737 = vpack.c.b16 %v2677, %v2676
    %v2738 = vpack.c.b16 %v2679, %v2678
    %v2739 = vpack.c.b16 %v2681, %v2680
    %v2740 = vpack.c.b16 %v2683, %v2682
    %v2741 = vpack.c.b16 %v2685, %v2684
    %v2742 = vpack.c.b16 %v2687, %v2686
    %v2743 = vpack.c.b16 %v2689, %v2688
    %v2744 = vpack.c.b16 %v2691, %v2690
    %v2745 = vpack.c.b16 %v2693, %v2692
    %v2746 = vpack.c.b16 %v2695, %v2694
    %v2747 = vpack.c.b16 %v2697, %v2696
    %v2748 = vpack.c.b16 %v2699, %v2698
    %v2749 = vpack.c.b16 %v2701, %v2700
    %v2750 = vpack.c.b16 %v2703, %v2702
    %v2751 = vpack.c.b16 %v2705, %v2704
    %v2752 = vpack.c.b16 %v2707, %v2706
    %v2753 = vpack.c.b16 %v2709, %v2708
    %v2754 = vpack.c.b16 %v2711, %v2710
    %v2755 = vpack.c.b16 %v2713, %v2712
    %v2756 = vpack.c.b16 %v2715, %v2714
    %v2757 = vpack.c.b16 %v2717, %v2716
    %2798 = vmatprep.subr.bf16.mxu0 0
    %2799 = vmatpush1.bf16.msra.mxu0 %v2718
    %2800 = vmatprep.subr.bf16.mxu0 0
    %2801 = vmatpush1.bf16.msra.mxu0 %v2719
    %2802 = vmatprep.subr.bf16.mxu0 0
    %2803 = vmatpush1.bf16.msra.mxu0 %v2720
    %2804 = vmatprep.subr.bf16.mxu0 0
    %2805 = vmatpush1.bf16.msra.mxu0 %v2721
    %2806 = vmatprep.subr.bf16.mxu0 0
    %2807 = vmatpush1.bf16.msra.mxu0 %v2722
    %2808 = vmatprep.subr.bf16.mxu0 0
    %2809 = vmatpush1.bf16.msra.mxu0 %v2723
    %2810 = vmatprep.subr.bf16.mxu0 0
    %2811 = vmatpush1.bf16.msra.mxu0 %v2724
    %2812 = vmatprep.subr.bf16.mxu0 0
    %2813 = vmatpush1.bf16.msra.mxu0 %v2725
    %2814 = vmatprep.subr.bf16.mxu0 0
    %2815 = vmatpush1.bf16.msra.mxu0 %v2726
    %2816 = vmatprep.subr.bf16.mxu0 0
    %2817 = vmatpush1.bf16.msra.mxu0 %v2727
    %2818 = vmatprep.subr.bf16.mxu0 0
    %2819 = vmatpush1.bf16.msra.mxu0 %v2728
    %2820 = vmatprep.subr.bf16.mxu0 0
    %2821 = vmatpush1.bf16.msra.mxu0 %v2729
    %2822 = vmatprep.subr.bf16.mxu0 0
    %2823 = vmatpush1.bf16.msra.mxu0 %v2730
    %2824 = vmatprep.subr.bf16.mxu0 0
    %2825 = vmatpush1.bf16.msra.mxu0 %v2731
    %2826 = vmatprep.subr.bf16.mxu0 0
    %2827 = vmatpush1.bf16.msra.mxu0 %v2732
    %2828 = vmatprep.subr.bf16.mxu0 0
    %2829 = vmatpush1.bf16.msra.mxu0 %v2733
    %2830 = vmatprep.mubr.bf16.mxu0 %v2463
    %2831 = vmatmul.mubr.bf16.gmra.mrb[0].mxu0 %v2461
    %v2832 = vpop.f32.mrb[0].mxu0
    %v2833 = vadd.f32 %v2556, %v2832
    %v2834 = vpop.f32.mrb[0].mxu0
    %v2835 = vpop.f32.mrb[0].mxu0
    %v2836 = vpop.f32.mrb[0].mxu0
    %2837 = vdwg.mxu0
    %2838 = vmatprep.subr.bf16.mxu0 0
    %2839 = vmatpush1.bf16.msra.mxu0 %v2734
    %2840 = vmatprep.subr.bf16.mxu0 0
    %2841 = vmatpush1.bf16.msra.mxu0 %v2735
    %2842 = vmatprep.subr.bf16.mxu0 0
    %2843 = vmatpush1.bf16.msra.mxu0 %v2736
    %2844 = vmatprep.subr.bf16.mxu0 0
    %2845 = vmatpush1.bf16.msra.mxu0 %v2737
    %2846 = vmatprep.subr.bf16.mxu0 0
    %2847 = vmatpush1.bf16.msra.mxu0 %v2738
    %2848 = vmatprep.subr.bf16.mxu0 0
    %2849 = vmatpush1.bf16.msra.mxu0 %v2739
    %2850 = vmatprep.subr.bf16.mxu0 0
    %2851 = vmatpush1.bf16.msra.mxu0 %v2740
    %2852 = vmatprep.subr.bf16.mxu0 0
    %2853 = vmatpush1.bf16.msra.mxu0 %v2741
    %2854 = vmatprep.subr.bf16.mxu0 0
    %2855 = vmatpush1.bf16.msra.mxu0 %v2742
    %2856 = vmatprep.subr.bf16.mxu0 0
    %2857 = vmatpush1.bf16.msra.mxu0 %v2743
    %2858 = vmatprep.subr.bf16.mxu0 0
    %2859 = vmatpush1.bf16.msra.mxu0 %v2744
    %2860 = vmatprep.subr.bf16.mxu0 0
    %2861 = vmatpush1.bf16.msra.mxu0 %v2745
    %2862 = vmatprep.subr.bf16.mxu0 0
    %2863 = vmatpush1.bf16.msra.mxu0 %v2746
    %2864 = vmatprep.subr.bf16.mxu0 0
    %2865 = vmatpush1.bf16.msra.mxu0 %v2747
    %2866 = vmatprep.subr.bf16.mxu0 0
    %2867 = vmatpush1.bf16.msra.mxu0 %v2748
    %2868 = vmatprep.subr.bf16.mxu0 0
    %2869 = vmatpush1.bf16.msra.mxu0 %v2749
    %2870 = vmatprep.mubr.bf16.mxu0 %v2467
    %2871 = vmatmul.mubr.bf16.gmra.mrb[0].mxu0 %v2465
    %v2872 = vpop.f32.mrb[0].mxu0
    %v2873 = vadd.f32 %v2833, %v2872
    %v2874 = vpop.f32.mrb[0].mxu0
    %v2875 = vpop.f32.mrb[0].mxu0
    %v2876 = vpop.f32.mrb[0].mxu0
    %2877 = vdwg.mxu0
    %2878 = vmatprep.subr.bf16.mxu0 0
    %2879 = vmatpush1.bf16.msra.mxu0 %v2750
    %2880 = vmatprep.subr.bf16.mxu0 0
    %2881 = vmatpush1.bf16.msra.mxu0 %v2751
    %2882 = vmatprep.subr.bf16.mxu0 0
    %2883 = vmatpush1.bf16.msra.mxu0 %v2752
    %2884 = vmatprep.subr.bf16.mxu0 0
    %2885 = vmatpush1.bf16.msra.mxu0 %v2753
    %2886 = vmatprep.subr.bf16.mxu0 0
    %2887 = vmatpush1.bf16.msra.mxu0 %v2754
    %2888 = vmatprep.subr.bf16.mxu0 0
    %2889 = vmatpush1.bf16.msra.mxu0 %v2755
    %2890 = vmatprep.subr.bf16.mxu0 0
    %2891 = vmatpush1.bf16.msra.mxu0 %v2756
    %2892 = vmatprep.subr.bf16.mxu0 0
    %2893 = vmatpush1.bf16.msra.mxu0 %v2757
    %2894 = vmatprep.subr.bf16.mxu0 0
    %2895 = vmatpush1.bf16.msra.mxu0 0
    %2896 = vmatprep.subr.bf16.mxu0 0
    %2897 = vmatpush1.bf16.msra.mxu0 0
    %2898 = vmatprep.subr.bf16.mxu0 0
    %2899 = vmatpush1.bf16.msra.mxu0 0
    %2900 = vmatprep.subr.bf16.mxu0 0
    %2901 = vmatpush1.bf16.msra.mxu0 0
    %2902 = vmatprep.subr.bf16.mxu0 0
    %2903 = vmatpush1.bf16.msra.mxu0 0
    %2904 = vmatprep.subr.bf16.mxu0 0
    %2905 = vmatpush1.bf16.msra.mxu0 0
    %2906 = vmatprep.subr.bf16.mxu0 0
    %2907 = vmatpush1.bf16.msra.mxu0 0
    %2908 = vmatprep.subr.bf16.mxu0 0
    %2909 = vmatpush1.bf16.msra.mxu0 0
    %2910 = vmatprep.mubr.bf16.mxu0 0
    %2911 = vmatmul.mubr.bf16.gmra.mrb[0].mxu0 %v2469
    %v2912 = vpop.f32.mrb[0].mxu0
    %v2913 = vadd.f32 %v2873, %v2912
    %v2914 = vpop.f32.mrb[0].mxu0
    %v2915 = vpop.f32.mrb[0].mxu0
    %v2916 = vpop.f32.mrb[0].mxu0
    %2917 = vdwg.mxu0
    %v2918 = vmax.f32 %v2913, 0.0
    %v2919 = vpack.c.bf16 %v2918, %v2918
    %v2920 = vld [vmem:[%s7] sm:$0xf]
    %v2921 = vld [vmem:[%s7 + $0x4] sm:$0xf]
    %v2922 = vld [vmem:[%s7 + $0x8] sm:$0xf]
    %v2923 = vld [vmem:[%s7 + $0xc] sm:$0xf]
    %v2924 = vld [vmem:[%s7 + $0x10] sm:$0xf]
    %v2925 = vld [vmem:[%s7 + $0x14] sm:$0xf]
    %v2926 = vld [vmem:[%s7 + $0x18] sm:$0xf]
    %v2927 = vld [vmem:[%s7 + $0x1c] sm:$0xf]
    %v2928 = vld [vmem:[%s7 + $0x20] sm:$0xf]
    %v2929 = vld [vmem:[%s7 + $0x24] sm:$0xf]
    %v2930 = vld [vmem:[%s7 + $0x28] sm:$0xf]
    %v2931 = vld [vmem:[%s7 + $0x2c] sm:$0xf]
    %v2932 = vld [vmem:[%s7 + $0x30] sm:$0xf]
    %v2933 = vld [vmem:[%s7 + $0x34] sm:$0xf]
    %v2934 = vld [vmem:[%s7 + $0x38] sm:$0xf]
    %v2935 = vld [vmem:[%s8] sm:$0x1]
    %v2937 = vlaneseq
    %v2938 = vshrl.u32 %v2937, 7
    %v2939 = vsub.s32 0, %v2938
    %v2940 = vrot.slane %v2935, %v2939
    %v2957 = vunpack.c.l.b16 %v2920
    %v2958 = vunpack.c.l.b16 %v2921
    %v2959 = vunpack.c.l.b16 %v2922
    %v2960 = vunpack.c.l.b16 %v2923
    %v2961 = vunpack.c.l.b16 %v2924
    %v2962 = vunpack.c.l.b16 %v2925
    %v2963 = vunpack.c.l.b16 %v2926
    %v2964 = vunpack.c.l.b16 %v2927
    %v2965 = vunpack.c.l.b16 %v2928
    %v2966 = vunpack.c.l.b16 %v2929
    %v2967 = vunpack.c.l.b16 %v2930
    %v2968 = vunpack.c.l.b16 %v2931
    %v2969 = vunpack.c.l.b16 %v2932
    %v2970 = vunpack.c.l.b16 %v2933
    %v2971 = vunpack.c.l.b16 %v2934
    %v2972 = vpack.c.b16 %v2958, %v2957
    %v2973 = vpack.c.b16 %v2960, %v2959
    %v2974 = vpack.c.b16 %v2962, %v2961
    %v2975 = vpack.c.b16 %v2964, %v2963
    %v2976 = vpack.c.b16 %v2966, %v2965
    %v2977 = vpack.c.b16 %v2968, %v2967
    %v2978 = vpack.c.b16 %v2970, %v2969
    %v2979 = vpack.c.b16 %v2971, %v2971
    %vm2987 = vcmask 982016
    %v2989 = vsel %vm2987, %v2919, 0
    %vm2991 = vcmask 1043456
    %v2993 = vsel %vm2991, %v2979, 0
    %2995 = vmatprep.subr.bf16.mxu0 0
    %2996 = vmatpush1.bf16.msra.mxu0 %v2972
    %2997 = vmatprep.subr.bf16.mxu0 0
    %2998 = vmatpush1.bf16.msra.mxu0 %v2973
    %2999 = vmatprep.subr.bf16.mxu0 0
    %3000 = vmatpush1.bf16.msra.mxu0 %v2974
    %3001 = vmatprep.subr.bf16.mxu0 0
    %3002 = vmatpush1.bf16.msra.mxu0 %v2975
    %3003 = vmatprep.subr.bf16.mxu0 0
    %3004 = vmatpush1.bf16.msra.mxu0 %v2976
    %3005 = vmatprep.subr.bf16.mxu0 0
    %3006 = vmatpush1.bf16.msra.mxu0 %v2977
    %3007 = vmatprep.subr.bf16.mxu0 0
    %3008 = vmatpush1.bf16.msra.mxu0 %v2978
    %3009 = vmatprep.subr.bf16.mxu0 0
    %3010 = vmatpush1.bf16.msra.mxu0 %v2993
    %3011 = vmatprep.subr.bf16.mxu0 0
    %3012 = vmatpush1.bf16.msra.mxu0 0
    %3013 = vmatprep.subr.bf16.mxu0 0
    %3014 = vmatpush1.bf16.msra.mxu0 0
    %3015 = vmatprep.subr.bf16.mxu0 0
    %3016 = vmatpush1.bf16.msra.mxu0 0
    %3017 = vmatprep.subr.bf16.mxu0 0
    %3018 = vmatpush1.bf16.msra.mxu0 0
    %3019 = vmatprep.subr.bf16.mxu0 0
    %3020 = vmatpush1.bf16.msra.mxu0 0
    %3021 = vmatprep.subr.bf16.mxu0 0
    %3022 = vmatpush1.bf16.msra.mxu0 0
    %3023 = vmatprep.subr.bf16.mxu0 0
    %3024 = vmatpush1.bf16.msra.mxu0 0
    %3025 = vmatprep.subr.bf16.mxu0 0
    %3026 = vmatpush1.bf16.msra.mxu0 0
    %3027 = vmatprep.mubr.bf16.mxu0 0
    %3028 = vmatmul.mubr.bf16.gmra.mrb[0].mxu0 %v2989
    %v3029 = vpop.f32.mrb[0].mxu0
    %v3030 = vadd.f32 %v2940, %v3029
    %v3031 = vpop.f32.mrb[0].mxu0
    %v3032 = vpop.f32.mrb[0].mxu0
    %v3033 = vpop.f32.mrb[0].mxu0
    %3034 = vdwg.mxu0
    %v3035 = vmax.f32 %v3030, 0.0
    %v3036 = vpack.c.bf16 %v3035, %v3035
    %v3037 = vld [vmem:[%s9] sm:$0xf]
    %v3038 = vld [vmem:[%s9 + $0x4] sm:$0xf]
    %v3039 = vld [vmem:[%s9 + $0x8] sm:$0xf]
    %v3040 = vld [vmem:[%s9 + $0xc] sm:$0xf]
    %v3041 = vld [vmem:[%s9 + $0x10] sm:$0xf]
    %v3042 = vld [vmem:[%s9 + $0x14] sm:$0xf]
    %v3043 = vld [vmem:[%s9 + $0x18] sm:$0xf]
    %v3044 = vld [vmem:[%s9 + $0x1c] sm:$0xf]
    %v3045 = vld [vmem:[%s9 + $0x20] sm:$0xf]
    %v3046 = vld [vmem:[%s9 + $0x24] sm:$0xf]
    %v3047 = vld [vmem:[%s9 + $0x28] sm:$0x3]
    %v3048 = vld [vmem:[%s10] sm:$0x1]
    %v3050 = vlaneseq
    %v3051 = vshrl.u32 %v3050, 7
    %v3052 = vsub.s32 0, %v3051
    %v3053 = vrot.slane %v3048, %v3052
    %v3066 = vunpack.c.l.b16 %v3037
    %v3067 = vunpack.c.l.b16 %v3038
    %v3068 = vunpack.c.l.b16 %v3039
    %v3069 = vunpack.c.l.b16 %v3040
    %v3070 = vunpack.c.l.b16 %v3041
    %v3071 = vunpack.c.l.b16 %v3042
    %v3072 = vunpack.c.l.b16 %v3043
    %v3073 = vunpack.c.l.b16 %v3044
    %v3074 = vunpack.c.l.b16 %v3045
    %v3075 = vunpack.c.l.b16 %v3046
    %v3076 = vunpack.c.l.b16 %v3047
    %v3077 = vpack.c.b16 %v3067, %v3066
    %v3078 = vpack.c.b16 %v3069, %v3068
    %v3079 = vpack.c.b16 %v3071, %v3070
    %v3080 = vpack.c.b16 %v3073, %v3072
    %v3081 = vpack.c.b16 %v3075, %v3074
    %v3082 = vpack.c.b16 %v3076, %v3076
    %vm3088 = vcmask 687104
    %v3090 = vsel %vm3088, %v3036, 0
    %vm3092 = vcmask 1041408
    %v3094 = vsel %vm3092, %v3082, 0
    %3096 = vmatprep.subr.bf16.mxu0 0
    %3097 = vmatpush1.bf16.msra.mxu0 %v3077
    %3098 = vmatprep.subr.bf16.mxu0 0
    %3099 = vmatpush1.bf16.msra.mxu0 %v3078
    %3100 = vmatprep.subr.bf16.mxu0 0
    %3101 = vmatpush1.bf16.msra.mxu0 %v3079
    %3102 = vmatprep.subr.bf16.mxu0 0
    %3103 = vmatpush1.bf16.msra.mxu0 %v3080
    %3104 = vmatprep.subr.bf16.mxu0 0
    %3105 = vmatpush1.bf16.msra.mxu0 %v3081
    %3106 = vmatprep.subr.bf16.mxu0 0
    %3107 = vmatpush1.bf16.msra.mxu0 %v3094
    %3108 = vmatprep.subr.bf16.mxu0 0
    %3109 = vmatpush1.bf16.msra.mxu0 0
    %3110 = vmatprep.subr.bf16.mxu0 0
    %3111 = vmatpush1.bf16.msra.mxu0 0
    %3112 = vmatprep.subr.bf16.mxu0 0
    %3113 = vmatpush1.bf16.msra.mxu0 0
    %3114 = vmatprep.subr.bf16.mxu0 0
    %3115 = vmatpush1.bf16.msra.mxu0 0
    %3116 = vmatprep.subr.bf16.mxu0 0
    %3117 = vmatpush1.bf16.msra.mxu0 0
    %3118 = vmatprep.subr.bf16.mxu0 0
    %3119 = vmatpush1.bf16.msra.mxu0 0
    %3120 = vmatprep.subr.bf16.mxu0 0
    %3121 = vmatpush1.bf16.msra.mxu0 0
    %3122 = vmatprep.subr.bf16.mxu0 0
    %3123 = vmatpush1.bf16.msra.mxu0 0
    %3124 = vmatprep.subr.bf16.mxu0 0
    %3125 = vmatpush1.bf16.msra.mxu0 0
    %3126 = vmatprep.subr.bf16.mxu0 0
    %3127 = vmatpush1.bf16.msra.mxu0 0
    %3128 = vmatprep.mubr.bf16.mxu0 0
    %3129 = vmatmul.mubr.bf16.gmra.mrb[0].mxu0 %v3090
    %v3130 = vpop.f32.mrb[0].mxu0
    %v3131 = vadd.f32 %v3053, %v3130
    %v3132 = vpop.f32.mrb[0].mxu0
    %v3133 = vpop.f32.mrb[0].mxu0
    %v3134 = vpop.f32.mrb[0].mxu0
    %3135 = vdwg.mxu0
    %vm3136 = vcmask 74752
    %v3137 = vsel %vm3136, %v3131, -inf
    %3138 = vmax.xlane.f32.xlu0 %v3137
    %v3139 = vpop.xlane.xlu0 %3138
    %v3140 = vsub.f32 %v3131, %v3139
    %v3141 = vmul.f32 %v3140, 1.442695
    %v3142 = vpow.pop %v3141
    %v3143 = vsel %vm3136, %v3142, 0.0
    %3144 = vadd.xlane.f32.xlu0 %v3143
    %v3145 = vpop.xlane.xlu0 %3144
    %v3146 = vlog2.pop %v3145
    %v3147 = vmul.f32 %v3146, 0.6931472
    %v3148 = vsub.f32 %v3140, %v3147
    %3149 = vst.msk [vmem:[#allocation2] sm:$0x3] %vm3136, %v3148
    // Predicated region
    $region46: #{pseudo_lenet_forward.1} parent=1 // pred_check
      _
    $region47: #{pseudo_lenet_forward.1} parent=1 // pred_check_branch
      %3151 = sbr.rel (0) target = $region49
    $region48: #{pseudo_lenet_forward.1} parent=1 // pred_region
      %s3153 = ssub.s32 32, 32
      %3154 = vsyncadd [#allocation3], %s3153
      %s3156 = sshll.u32 [#allocation2], 4
      %s3157 = int_to_ptr.vmem [resolvable:$true] %s3156
      %3159 = dma.vmem_to_hbm [thread:$0]  %s3157, 32, %s11, [#allocation3]
    $region49: #{pseudo_lenet_forward.1} parent=1 // pred_fallthru
      _
    // Predicated region
    $region50: #{pseudo_lenet_forward.1} parent=1 // pred_check
      _
    $region51: #{pseudo_lenet_forward.1} parent=1 // pred_check_branch
      %3161 = sbr.rel (0) target = $region53
    $region52: #{pseudo_lenet_forward.1} parent=1 // pred_region
      %3162 = dma.done [#allocation3], 32
    $region53: #{pseudo_lenet_forward.1} parent=1 // pred_fallthru
      _
    %3163 = vsyncpa [#allocation3], 1

</llo_original>
